<compile_context>
chip_gen: v5e
topology: v5e:2x2
jax: 0.10.0
libtpu: 0.0.40
codegen_flags: <defaults>
</compile_context>

<pallas_src>
import functools

import jax
import jax.numpy as jnp
from jax.experimental import pallas as pl
from jax.experimental.pallas import tpu as pltpu


def _round_up(x, m):
    return (x + m - 1) // m * m


def _cdiv(a, b):
    return (a + b - 1) // b


@functools.lru_cache(maxsize=None)
def _pick_vmem_limit():
    """<= 3/4 of physical VMEM, capped at 96 MiB (v5e/v6e); ~48 MiB on v7x."""
    try:
        cap = int(pltpu.get_tpu_info().vmem_capacity_bytes)
    except Exception:
        cap = 64 * 1024 * 1024            # conservative (v7x-sized) fallback
    return min(max(cap * 3 // 4, 32 * 1024 * 1024), 96 * 1024 * 1024)


# ----------------------------- Pallas kernels ------------------------------


def conv_stats_implicit_kernel(x0_ref, x1_ref, mask_ref, w_ref, b_ref,
                               conv_ref, stats_ref, *, tap_offsets, c_in):
    """Implicit-im2col conv tile (stride==1) + masked partial BN stats.

    x0_ref   : (1, C_in, ts)      bf16  flattened padded image, current tile
    x1_ref   : (1, C_in, H_ext)   bf16  halo (next H_ext lanes of the same array)
    mask_ref : (1, ts)            f32   1.0 on valid output lanes, 0.0 on garbage/tail
    w_ref    : (C_out, K*K*C_in)  bf16  tap-major weights (tap t -> cols [t*C_in,(t+1)*C_in))
    b_ref    : (C_out, 1)         f32
    conv_ref : (1, C_out, ts)           conv output tile (bias included)
    stats_ref: (1, 1, C_out, 2)   f32   per-tile [sum, sum_sq] of the bias-free, masked conv
    """
    ts = x0_ref.shape[-1]
    buf = jnp.concatenate([x0_ref[0], x1_ref[0]], axis=-1)       # (C_in, ts + H_ext)
    z = jnp.zeros((w_ref.shape[0], ts), jnp.float32)
    for t, off in enumerate(tap_offsets):                        # K*K small MXU dots
        wt = w_ref[:, t * c_in:(t + 1) * c_in]                   # (C_out, C_in)
        xt = buf[:, off:off + ts]                                # shifted lane-slice
        z = z + jnp.dot(wt, xt, preferred_element_type=jnp.float32)
    conv_ref[0] = (z + b_ref[...]).astype(conv_ref.dtype)
    zm = z * mask_ref[...]                                       # drop garbage/tail lanes
    s0 = jnp.sum(zm, axis=1, keepdims=True)
    s1 = jnp.sum(zm * zm, axis=1, keepdims=True)
    stats_ref[0, 0] = jnp.concatenate([s0, s1], axis=1)          # (C_out, 2), one store


def conv_stats_explicit_kernel(a_ref, w_ref, b_ref, conv_ref, stats_ref):
    """im2col-GEMM conv tile + partial BN stats (padding lanes of A are zero -> no mask)."""
    z = jnp.dot(w_ref[...], a_ref[0], preferred_element_type=jnp.float32)
    conv_ref[0] = (z + b_ref[...]).astype(conv_ref.dtype)
    s0 = jnp.sum(z, axis=1, keepdims=True)
    s1 = jnp.sum(z * z, axis=1, keepdims=True)
    stats_ref[0, 0] = jnp.concatenate([s0, s1], axis=1)


def bn_act_kernel(x_ref, scale_ref, shift_ref, alpha_ref, o_ref, *,
                  batch_norm, activation):
    """Fused BatchNorm (precomputed per-channel scale/shift) + activation, bf16 -> f32."""
    x = x_ref[0].astype(jnp.float32)                             # (C_out, ts)
    if batch_norm:
        x = x * scale_ref[...] + shift_ref[...]
    if activation == "prelu":
        x = jnp.where(x >= 0, x, alpha_ref[0] * x)               # alpha: SMEM scalar
    elif activation == "leakyrelu":
        x = jnp.where(x >= 0, x, 0.2 * x)
    elif activation == "tanh":
        x = jnp.tanh(x)
    o_ref[0] = x


# ------------------------------ glue (plain JAX) ---------------------------


def _im2col(x, K, stride, s_pad, dtype):
    """x: (N,C,H,W) -> (N, C*K*K, s_pad); rows ci*K*K + kh*K + kw, cols h*Wo + w.
    Built directly in the target row order (stack(axis=2)) -> no XLA transpose pass."""
    N, C, H, W = x.shape
    pad = K // 2
    xp = jnp.pad(x.astype(dtype), ((0, 0), (0, 0), (pad, pad), (pad, pad)))
    Ho = (H + 2 * pad - K) // stride + 1
    Wo = (W + 2 * pad - K) // stride + 1
    cols = [xp[:, :, kh:kh + stride * Ho:stride, kw:kw + stride * Wo:stride]
            for kh in range(K) for kw in range(K)]
    patches = jnp.stack(cols, axis=2)                 # (N, C, K*K, Ho, Wo)
    A = patches.reshape(N, C * K * K, Ho * Wo)
    S = Ho * Wo
    if s_pad > S:
        A = jnp.pad(A, ((0, 0), (0, 0), (0, s_pad - S)))
    return A


def convolutional_block(x, params, *, kernel_size, stride=1, batch_norm=False,
                        activation=None, ts_max=2048, eps=1e-5,
                        compute_dtype=jnp.bfloat16):
    if activation is not None:
        activation = activation.lower()
        assert activation in {"prelu", "leakyrelu", "tanh"}

    w = params["weight"]                       # (C_out, C_in, K, K)
    b = params["bias"]                         # (C_out,)
    C_out, C_in, K, _ = w.shape
    assert K == kernel_size
    N, _, H, W = x.shape
    pad = K // 2
    Ho = (H + 2 * pad - K) // stride + 1
    Wo = (W + 2 * pad - K) // stride + 1
    Hp, Wp = H + 2 * pad, W + 2 * pad
    Kdim = C_in * K * K
    S = Ho * Wo

    post = batch_norm or (activation is not None)
    inter_dtype = compute_dtype if post else jnp.float32   # bf16 intermediate iff rewritten
    inter_bytes = jnp.dtype(inter_dtype).itemsize

    # Implicit im2col only for stride 1 (other strides would waste stride^2 of compute).
    implicit = (stride == 1)
    if implicit:
        max_off = (K - 1) * Wp + (K - 1)
        H_ext = _round_up(max(max_off, 1), 128)
        if H_ext > ts_max // 2:                # very wide rows: halo too large, fall back
            implicit = False
    S_virtual = Ho * Wp if implicit else S     # implicit rasters over padded width
    rows_in = C_in if implicit else Kdim

    # ---- tile size: large (HBM roofline needs >=512 lanes), but within VMEM/vreg budgets
    vmem_limit = _pick_vmem_limit()
    bytes_per_lane = 2 * 2 * rows_in + 2 * inter_bytes * C_out + (8 if implicit else 0)
    ts_vmem = max(128, (vmem_limit // 2) // bytes_per_lane // 128 * 128)
    ts_vreg = max(512, 16384 // C_out // 128 * 128)  # keep z (C_out, ts) f32 <= ~16 vregs
    ts_cap = max(128, min(ts_max, ts_vmem, ts_vreg))
    num_tiles = _cdiv(S_virtual, ts_cap)
    ts = _round_up(_cdiv(S_virtual, num_tiles), 128)  # bounds padding waste per tile
    if implicit:
        ts = _round_up(ts, H_ext)                     # halo index map needs ts % H_ext == 0
    S_pad = num_tiles * ts

    # ---- grid: larger parallel axis first so both v7x TensorCores always get work ----
    n_first = N >= num_tiles
    grid = (N, num_tiles) if n_first else (num_tiles, N)
    if n_first:
        def wrap(f):
            return lambda n, s: f(n, s)
    else:
        def wrap(f):
            return lambda s, n: f(n, s)

    b_col = b.reshape(C_out, 1).astype(jnp.float32)
    cparams = pltpu.CompilerParams(
        dimension_semantics=("parallel", "parallel"),
        vmem_limit_bytes=vmem_limit)
    conv_spec = pl.BlockSpec((1, C_out, ts), wrap(lambda n, s: (n, 0, s)))
    stats_spec = pl.BlockSpec((1, 1, C_out, 2), wrap(lambda n, s: (n, s, 0, 0)))
    out_shapes = [jax.ShapeDtypeStruct((N, C_out, S_pad), inter_dtype),
                  jax.ShapeDtypeStruct((N, num_tiles, C_out, 2), jnp.float32)]

    # --- kernel 1: conv + per-tile partial batch statistics --------------------------
    if implicit:
        xp = jnp.pad(x.astype(compute_dtype),
                     ((0, 0), (0, 0), (pad, pad), (pad, pad)))
        flat = xp.reshape(N, C_in, Hp * Wp)
        Lx = max(S_pad + H_ext, Hp * Wp)
        flat = jnp.pad(flat, ((0, 0), (0, 0), (0, Lx - Hp * Wp)))
        q = jnp.arange(S_pad, dtype=jnp.int32)
        mask = (((q % Wp) < Wo) & (q < Ho * Wp)).astype(jnp.float32)[None, :]
        Wf = w.transpose(0, 2, 3, 1).reshape(C_out, K * K * C_in).astype(compute_dtype)
        taps = tuple(kh * Wp + kw for kh in range(K) for kw in range(K))
        conv_out, stats = pl.pallas_call(
            functools.partial(conv_stats_implicit_kernel,
                              tap_offsets=taps, c_in=C_in),
            grid=grid,
            in_specs=[
                pl.BlockSpec((1, C_in, ts), wrap(lambda n, s: (n, 0, s))),
                pl.BlockSpec((1, C_in, H_ext),
                             wrap(lambda n, s: (n, 0, (s + 1) * (ts // H_ext)))),
                pl.BlockSpec((1, ts), wrap(lambda n, s: (0, s))),
                pl.BlockSpec((C_out, K * K * C_in), wrap(lambda n, s: (0, 0))),
                pl.BlockSpec((C_out, 1), wrap(lambda n, s: (0, 0))),
            ],
            out_specs=[conv_spec, stats_spec],
            out_shape=out_shapes,
            compiler_params=cparams,
        )(flat, flat, mask, Wf, b_col)
    else:
        A = _im2col(x, K, stride, S_pad, compute_dtype)            # (N, Kdim, S_pad) bf16
        Wf = w.reshape(C_out, Kdim).astype(compute_dtype)
        conv_out, stats = pl.pallas_call(
            conv_stats_explicit_kernel,
            grid=grid,
            in_specs=[
                pl.BlockSpec((1, Kdim, ts), wrap(lambda n, s: (n, 0, s))),
                pl.BlockSpec((C_out, Kdim), wrap(lambda n, s: (0, 0))),
                pl.BlockSpec((C_out, 1), wrap(lambda n, s: (0, 0))),
            ],
            out_specs=[conv_spec, stats_spec],
            out_shape=out_shapes,
            compiler_params=cparams,
        )(A, Wf, b_col)

    # --- kernel 2: BN (folded scale/shift) + activation -------------------------------
    if post:
        if batch_norm:
            # TODO(synk): single-pass E[z^2]-E[z]^2 cancels badly for channels with
            # |mean| >> std; use a two-pass/Welford variant if this sits deep in a net.
            M = float(N * S)                                   # valid positions only
            tot = jnp.sum(stats, axis=(0, 1))                  # (C_out, 2) f32
            mean_z = tot[:, 0:1] / M
            var = jnp.maximum(tot[:, 1:2] / M - mean_z * mean_z, 0.0)   # biased (training)
            mean = mean_z + b_col
            gamma = params.get("gamma", jnp.ones((C_out,), jnp.float32))
            beta = params.get("beta", jnp.zeros((C_out,), jnp.float32))
            inv = jax.lax.rsqrt(var + eps)
            scale = gamma.reshape(C_out, 1).astype(jnp.float32) * inv
            shift = beta.reshape(C_out, 1).astype(jnp.float32) - mean * scale
        else:
            scale = jnp.ones((C_out, 1), jnp.float32)
            shift = jnp.zeros((C_out, 1), jnp.float32)
        alpha = jnp.asarray(params.get("prelu_alpha", 0.25), jnp.float32).reshape(1)

        y = pl.pallas_call(
            functools.partial(bn_act_kernel, batch_norm=batch_norm,
                              activation=activation),
            grid=grid,
            in_specs=[
                conv_spec,
                pl.BlockSpec((C_out, 1), wrap(lambda n, s: (0, 0))),
                pl.BlockSpec((C_out, 1), wrap(lambda n, s: (0, 0))),
                pl.BlockSpec(memory_space=pltpu.MemorySpace.SMEM),
            ],
            out_specs=pl.BlockSpec((1, C_out, ts), wrap(lambda n, s: (n, 0, s))),
            out_shape=jax.ShapeDtypeStruct((N, C_out, S_pad), jnp.float32),
            compiler_params=cparams,
        )(conv_out, scale, shift, alpha)
    else:
        y = conv_out                                           # already float32

    # NCHW already; only drop padded / garbage lanes.
    if implicit:
        out = y[:, :, :Ho * Wp].reshape(N, C_out, Ho, Wp)[:, :, :, :Wo]
    else:
        if S_pad != S:
            y = y[:, :, :S]
        out = y.reshape(N, C_out, Ho, Wo)
    return out


# ------------------------------ reference ----------------------------------


def reference(x, params, *, stride, batch_norm, activation, eps=1e-5,
              compute_dtype=jnp.float32):
    w, b = params["weight"], params["bias"]
    K = w.shape[2]
    pad = K // 2
    y = jax.lax.conv_general_dilated(
        x.astype(compute_dtype), w.astype(compute_dtype),
        window_strides=(stride, stride),
        padding=[(pad, pad), (pad, pad)],
        dimension_numbers=("NCHW", "OIHW", "NCHW"),
        preferred_element_type=jnp.float32)
    y = y + b[None, :, None, None]
    if batch_norm:
        mean = y.mean(axis=(0, 2, 3), keepdims=True)
        var = y.var(axis=(0, 2, 3), keepdims=True)       # biased (PyTorch training mode)
        y = (y - mean) * jax.lax.rsqrt(var + eps)
        y = y * params["gamma"][None, :, None, None] + \
            params["beta"][None, :, None, None]
    if activation == "prelu":
        y = jnp.where(y >= 0, y, params["prelu_alpha"] * y)
    elif activation == "leakyrelu":
        y = jnp.where(y >= 0, y, 0.2 * y)
    elif activation == "tanh":
        y = jnp.tanh(y)
    return y


# --------------------------------- main -------------------------------------


if __name__ == "__main__":
    N, C_in, H, W = 2, 4, 16, 16
    C_out, K = 8, 3

    key = jax.random.PRNGKey(0)
    kx, kw, kb = jax.random.split(key, 3)
    x = jax.random.normal(kx, (N, C_in, H, W), dtype=jnp.float32)

    params = {
        "weight": 0.1 * jax.random.normal(kw, (C_out, C_in, K, K), dtype=jnp.float32),
        "bias": 0.1 * jax.random.normal(kb, (C_out,), dtype=jnp.float32),
        "gamma": jnp.ones((C_out,), jnp.float32),       # BatchNorm2d init
        "beta": jnp.zeros((C_out,), jnp.float32),
        "prelu_alpha": jnp.float32(0.25),               # nn.PReLU() default
    }

    # --- case 1: stride 1, BN + PReLU (implicit-im2col path) -------------------------
    fwd1 = jax.jit(functools.partial(convolutional_block, kernel_size=K, stride=1,
                                     batch_norm=True, activation="prelu"))
    out1 = jax.block_until_ready(fwd1(x, params))
    assert out1.shape == (N, C_out, H, W), out1.shape
    ref1_bf16 = reference(x, params, stride=1, batch_norm=True, activation="prelu",
                          compute_dtype=jnp.bfloat16)
    ref1_f32 = reference(x, params, stride=1, batch_norm=True, activation="prelu",
                         compute_dtype=jnp.float32)
    err1b = float(jnp.max(jnp.abs(out1 - ref1_bf16)))
    err1f = float(jnp.max(jnp.abs(out1 - ref1_f32)))
    assert err1b < 2e-2, err1b      # bf16 GEMM operands + bf16 intermediate rounding
    assert err1f < 5e-2, err1f

    # --- case 2: stride 2, BN + LeakyReLU (explicit im2col fallback path) -------------
    fwd2 = jax.jit(functools.partial(convolutional_block, kernel_size=K, stride=2,
                                     batch_norm=True, activation="leakyrelu"))
    out2 = jax.block_until_ready(fwd2(x, params))
    Ho2 = (H + 2 * (K // 2) - K) // 2 + 1
    assert out2.shape == (N, C_out, Ho2, Ho2), out2.shape
    ref2_f32 = reference(x, params, stride=2, batch_norm=True, activation="leakyrelu",
                         compute_dtype=jnp.float32)
    err2f = float(jnp.max(jnp.abs(out2 - ref2_f32)))
    assert err2f < 5e-2, err2f

    print("KERNEL_OK")
</pallas_src>

<mosaic_0001>
module attributes {stable_mosaic.version = 11 : i64} {
  func.func @bn_act_kernel(%arg0: i32, %arg1: i32, %arg2: memref<1x8x384xbf16, #tpu.memory_space<vmem>>, %arg3: memref<8x1xf32, #tpu.memory_space<vmem>>, %arg4: memref<8x1xf32, #tpu.memory_space<vmem>>, %arg5: memref<1xf32, #tpu.memory_space<smem>>, %arg6: memref<1x8x384xf32, #tpu.memory_space<vmem>>) attributes {dimension_semantics = [#tpu.dimension_semantics<parallel>, #tpu.dimension_semantics<parallel>], iteration_bounds = array<i64: 2, 1>, scalar_prefetch = 0 : i64, scratch_operands = 0 : i64, tpu.core_type = #tpu.core_type<tc>, window_params = [{transform_indices = @transform_0, window_bounds = array<i64: 1, 8, 384>}, {pipeline_mode = #tpu.pipeline_mode<synchronous>, transform_indices = @transform_1, window_bounds = array<i64: 8, 1>}, {pipeline_mode = #tpu.pipeline_mode<synchronous>, transform_indices = @transform_2, window_bounds = array<i64: 8, 1>}, {transform_indices = @transform_3, window_bounds = array<i64: 1>}, {transform_indices = @transform_4, window_bounds = array<i64: 1, 8, 384>}]} {
    %c0 = arith.constant 0 : index
    %c0_0 = arith.constant 0 : index
    %c0_1 = arith.constant 0 : index
    %0 = vector.load %arg2[%c0, %c0_0, %c0_1] : memref<1x8x384xbf16, #tpu.memory_space<vmem>>, vector<1x8x384xbf16>
    %1 = vector.shape_cast %0 : vector<1x8x384xbf16> to vector<8x384xbf16>
    %2 = arith.extf %1 : vector<8x384xbf16> to vector<8x384xf32>
    %c0_2 = arith.constant 0 : index
    %c0_3 = arith.constant 0 : index
    %3 = vector.load %arg3[%c0_2, %c0_3] : memref<8x1xf32, #tpu.memory_space<vmem>>, vector<8x1xf32>
    %4 = vector.broadcast %3 : vector<8x1xf32> to vector<8x384xf32>
    %5 = arith.mulf %2, %4 : vector<8x384xf32>
    %c0_4 = arith.constant 0 : index
    %c0_5 = arith.constant 0 : index
    %6 = vector.load %arg4[%c0_4, %c0_5] : memref<8x1xf32, #tpu.memory_space<vmem>>, vector<8x1xf32>
    %7 = vector.broadcast %6 : vector<8x1xf32> to vector<8x384xf32>
    %8 = arith.addf %5, %7 : vector<8x384xf32>
    %cst = arith.constant 0.000000e+00 : f32
    %9 = vector.broadcast %cst : f32 to vector<8x384xf32>
    %10 = arith.cmpf oge, %8, %9 : vector<8x384xf32>
    %c0_6 = arith.constant 0 : index
    %11 = memref.load %arg5[%c0_6] : memref<1xf32, #tpu.memory_space<smem>>
    %12 = vector.broadcast %11 : f32 to vector<8x384xf32>
    %13 = arith.mulf %12, %8 : vector<8x384xf32>
    %14 = arith.select %10, %8, %13 : vector<8x384xi1>, vector<8x384xf32>
    %c0_7 = arith.constant 0 : index
    %c0_8 = arith.constant 0 : index
    %c0_9 = arith.constant 0 : index
    %15 = vector.load %arg6[%c0_7, %c0_8, %c0_9] : memref<1x8x384xf32, #tpu.memory_space<vmem>>, vector<1x8x384xf32>
    %16 = vector.shape_cast %15 : vector<1x8x384xf32> to vector<8x384xf32>
    %17 = vector.shape_cast %14 : vector<8x384xf32> to vector<1x8x384xf32>
    tpu.vector_store %arg6[%c0_7, %c0_8, %c0_9], %17 {strides = array<i32>} : memref<1x8x384xf32, #tpu.memory_space<vmem>>, vector<1x8x384xf32>,
    return
  }
  func.func @transform_0(%arg0: i32, %arg1: i32) -> (i32, i32, i32) {
    %c0_i32 = arith.constant 0 : i32
    %c0_i32_0 = arith.constant 0 : i32
    return %arg0, %c0_i32, %arg1 : i32, i32, i32
  }
  func.func @transform_1(%arg0: i32, %arg1: i32) -> (i32, i32) {
    %c0_i32 = arith.constant 0 : i32
    %c0_i32_0 = arith.constant 0 : i32
    %c0_i32_1 = arith.constant 0 : i32
    return %c0_i32, %c0_i32_0 : i32, i32
  }
  func.func @transform_2(%arg0: i32, %arg1: i32) -> (i32, i32) {
    %c0_i32 = arith.constant 0 : i32
    %c0_i32_0 = arith.constant 0 : i32
    %c0_i32_1 = arith.constant 0 : i32
    return %c0_i32, %c0_i32_0 : i32, i32
  }
  func.func @transform_3(%arg0: i32, %arg1: i32) -> i32 {
    %c0_i32 = arith.constant 0 : i32
    %c0_i32_0 = arith.constant 0 : i32
    return %c0_i32 : i32
  }
  func.func @transform_4(%arg0: i32, %arg1: i32) -> (i32, i32, i32) {
    %c0_i32 = arith.constant 0 : i32
    %c0_i32_0 = arith.constant 0 : i32
    return %arg0, %c0_i32, %arg1 : i32, i32, i32
  }
}

module attributes {stable_mosaic.version = 11 : i64} {
  func.func @conv_stats_implicit_kernel(%arg0: i32, %arg1: i32, %arg2: memref<1x4x384xbf16, #tpu.memory_space<vmem>>, %arg3: memref<1x4x128xbf16, #tpu.memory_space<vmem>>, %arg4: memref<1x384xf32, #tpu.memory_space<vmem>>, %arg5: memref<8x36xbf16, #tpu.memory_space<vmem>>, %arg6: memref<8x1xf32, #tpu.memory_space<vmem>>, %arg7: memref<1x8x384xbf16, #tpu.memory_space<vmem>>, %arg8: memref<1x1x8x2xf32, #tpu.memory_space<vmem>>) attributes {dimension_semantics = [#tpu.dimension_semantics<parallel>, #tpu.dimension_semantics<parallel>], iteration_bounds = array<i64: 2, 1>, scalar_prefetch = 0 : i64, scratch_operands = 0 : i64, tpu.core_type = #tpu.core_type<tc>, window_params = [{transform_indices = @transform_0, window_bounds = array<i64: 1, 4, 384>}, {transform_indices = @transform_1, window_bounds = array<i64: 1, 4, 128>}, {transform_indices = @transform_2, window_bounds = array<i64: 1, 384>}, {pipeline_mode = #tpu.pipeline_mode<synchronous>, transform_indices = @transform_3, window_bounds = array<i64: 8, 36>}, {pipeline_mode = #tpu.pipeline_mode<synchronous>, transform_indices = @transform_4, window_bounds = array<i64: 8, 1>}, {transform_indices = @transform_5, window_bounds = array<i64: 1, 8, 384>}, {transform_indices = @transform_6, window_bounds = array<i64: 1, 1, 8, 2>}]} {
    %c0 = arith.constant 0 : index
    %c0_0 = arith.constant 0 : index
    %c0_1 = arith.constant 0 : index
    %0 = vector.load %arg2[%c0, %c0_0, %c0_1] : memref<1x4x384xbf16, #tpu.memory_space<vmem>>, vector<1x4x384xbf16>
    %1 = vector.shape_cast %0 : vector<1x4x384xbf16> to vector<4x384xbf16>
    %c0_2 = arith.constant 0 : index
    %c0_3 = arith.constant 0 : index
    %c0_4 = arith.constant 0 : index
    %2 = vector.load %arg3[%c0_2, %c0_3, %c0_4] : memref<1x4x128xbf16, #tpu.memory_space<vmem>>, vector<1x4x128xbf16>
    %3 = vector.shape_cast %2 : vector<1x4x128xbf16> to vector<4x128xbf16>
    %4 = tpu.concatenate %1, %3 in 1 : vector<4x384xbf16>, vector<4x128xbf16> -> vector<4x512xbf16>
    %cst = arith.constant 0.000000e+00 : f32
    %5 = vector.broadcast %cst : f32 to vector<8x384xf32>
    %c0_5 = arith.constant 0 : index
    %c0_6 = arith.constant 0 : index
    %6 = vector.load %arg5[%c0_5, %c0_6] : memref<8x36xbf16, #tpu.memory_space<vmem>>, vector<8x4xbf16>
    %7 = vector.extract_strided_slice %4 {offsets = [0, 0], sizes = [4, 384], strides = [1, 1]} : vector<4x512xbf16> to vector<4x384xbf16>
    %cst_7 = arith.constant dense<0.000000e+00> : vector<8x384xf32>
    %8 = tpu.matmul %6, %7, %cst_7 {dimension_numbers = #tpu.dot_dimension_numbers<[1], [0], [0], [1], [0, 0, 1, 1], [], []>} : vector<8x4xbf16>, vector<4x384xbf16>, vector<8x384xf32> -> vector<8x384xf32>
    %9 = arith.addf %5, %8 : vector<8x384xf32>
    %c0_8 = arith.constant 0 : index
    %c4 = arith.constant 4 : index
    %10 = vector.load %arg5[%c0_8, %c4] : memref<8x36xbf16, #tpu.memory_space<vmem>>, vector<8x4xbf16>
    %11 = vector.extract_strided_slice %4 {offsets = [0, 1], sizes = [4, 384], strides = [1, 1]} : vector<4x512xbf16> to vector<4x384xbf16>
    %cst_9 = arith.constant dense<0.000000e+00> : vector<8x384xf32>
    %12 = tpu.matmul %10, %11, %cst_9 {dimension_numbers = #tpu.dot_dimension_numbers<[1], [0], [0], [1], [0, 0, 1, 1], [], []>} : vector<8x4xbf16>, vector<4x384xbf16>, vector<8x384xf32> -> vector<8x384xf32>
    %13 = arith.addf %9, %12 : vector<8x384xf32>
    %c0_10 = arith.constant 0 : index
    %c8 = arith.constant 8 : index
    %14 = vector.load %arg5[%c0_10, %c8] : memref<8x36xbf16, #tpu.memory_space<vmem>>, vector<8x4xbf16>
    %15 = vector.extract_strided_slice %4 {offsets = [0, 2], sizes = [4, 384], strides = [1, 1]} : vector<4x512xbf16> to vector<4x384xbf16>
    %cst_11 = arith.constant dense<0.000000e+00> : vector<8x384xf32>
    %16 = tpu.matmul %14, %15, %cst_11 {dimension_numbers = #tpu.dot_dimension_numbers<[1], [0], [0], [1], [0, 0, 1, 1], [], []>} : vector<8x4xbf16>, vector<4x384xbf16>, vector<8x384xf32> -> vector<8x384xf32>
    %17 = arith.addf %13, %16 : vector<8x384xf32>
    %c0_12 = arith.constant 0 : index
    %c12 = arith.constant 12 : index
    %18 = vector.load %arg5[%c0_12, %c12] : memref<8x36xbf16, #tpu.memory_space<vmem>>, vector<8x4xbf16>
    %19 = vector.extract_strided_slice %4 {offsets = [0, 18], sizes = [4, 384], strides = [1, 1]} : vector<4x512xbf16> to vector<4x384xbf16>
    %cst_13 = arith.constant dense<0.000000e+00> : vector<8x384xf32>
    %20 = tpu.matmul %18, %19, %cst_13 {dimension_numbers = #tpu.dot_dimension_numbers<[1], [0], [0], [1], [0, 0, 1, 1], [], []>} : vector<8x4xbf16>, vector<4x384xbf16>, vector<8x384xf32> -> vector<8x384xf32>
    %21 = arith.addf %17, %20 : vector<8x384xf32>
    %c0_14 = arith.constant 0 : index
    %c16 = arith.constant 16 : index
    %22 = vector.load %arg5[%c0_14, %c16] : memref<8x36xbf16, #tpu.memory_space<vmem>>, vector<8x4xbf16>
    %23 = vector.extract_strided_slice %4 {offsets = [0, 19], sizes = [4, 384], strides = [1, 1]} : vector<4x512xbf16> to vector<4x384xbf16>
    %cst_15 = arith.constant dense<0.000000e+00> : vector<8x384xf32>
    %24 = tpu.matmul %22, %23, %cst_15 {dimension_numbers = #tpu.dot_dimension_numbers<[1], [0], [0], [1], [0, 0, 1, 1], [], []>} : vector<8x4xbf16>, vector<4x384xbf16>, vector<8x384xf32> -> vector<8x384xf32>
    %25 = arith.addf %21, %24 : vector<8x384xf32>
    %c0_16 = arith.constant 0 : index
    %c20 = arith.constant 20 : index
    %26 = vector.load %arg5[%c0_16, %c20] : memref<8x36xbf16, #tpu.memory_space<vmem>>, vector<8x4xbf16>
    %27 = vector.extract_strided_slice %4 {offsets = [0, 20], sizes = [4, 384], strides = [1, 1]} : vector<4x512xbf16> to vector<4x384xbf16>
    %cst_17 = arith.constant dense<0.000000e+00> : vector<8x384xf32>
    %28 = tpu.matmul %26, %27, %cst_17 {dimension_numbers = #tpu.dot_dimension_numbers<[1], [0], [0], [1], [0, 0, 1, 1], [], []>} : vector<8x4xbf16>, vector<4x384xbf16>, vector<8x384xf32> -> vector<8x384xf32>
    %29 = arith.addf %25, %28 : vector<8x384xf32>
    %c0_18 = arith.constant 0 : index
    %c24 = arith.constant 24 : index
    %30 = vector.load %arg5[%c0_18, %c24] : memref<8x36xbf16, #tpu.memory_space<vmem>>, vector<8x4xbf16>
    %31 = vector.extract_strided_slice %4 {offsets = [0, 36], sizes = [4, 384], strides = [1, 1]} : vector<4x512xbf16> to vector<4x384xbf16>
    %cst_19 = arith.constant dense<0.000000e+00> : vector<8x384xf32>
    %32 = tpu.matmul %30, %31, %cst_19 {dimension_numbers = #tpu.dot_dimension_numbers<[1], [0], [0], [1], [0, 0, 1, 1], [], []>} : vector<8x4xbf16>, vector<4x384xbf16>, vector<8x384xf32> -> vector<8x384xf32>
    %33 = arith.addf %29, %32 : vector<8x384xf32>
    %c0_20 = arith.constant 0 : index
    %c28 = arith.constant 28 : index
    %34 = vector.load %arg5[%c0_20, %c28] : memref<8x36xbf16, #tpu.memory_space<vmem>>, vector<8x4xbf16>
    %35 = vector.extract_strided_slice %4 {offsets = [0, 37], sizes = [4, 384], strides = [1, 1]} : vector<4x512xbf16> to vector<4x384xbf16>
    %cst_21 = arith.constant dense<0.000000e+00> : vector<8x384xf32>
    %36 = tpu.matmul %34, %35, %cst_21 {dimension_numbers = #tpu.dot_dimension_numbers<[1], [0], [0], [1], [0, 0, 1, 1], [], []>} : vector<8x4xbf16>, vector<4x384xbf16>, vector<8x384xf32> -> vector<8x384xf32>
    %37 = arith.addf %33, %36 : vector<8x384xf32>
    %c0_22 = arith.constant 0 : index
    %c32 = arith.constant 32 : index
    %38 = vector.load %arg5[%c0_22, %c32] : memref<8x36xbf16, #tpu.memory_space<vmem>>, vector<8x4xbf16>
    %39 = vector.extract_strided_slice %4 {offsets = [0, 38], sizes = [4, 384], strides = [1, 1]} : vector<4x512xbf16> to vector<4x384xbf16>
    %cst_23 = arith.constant dense<0.000000e+00> : vector<8x384xf32>
    %40 = tpu.matmul %38, %39, %cst_23 {dimension_numbers = #tpu.dot_dimension_numbers<[1], [0], [0], [1], [0, 0, 1, 1], [], []>} : vector<8x4xbf16>, vector<4x384xbf16>, vector<8x384xf32> -> vector<8x384xf32>
    %41 = arith.addf %37, %40 : vector<8x384xf32>
    %c0_24 = arith.constant 0 : index
    %c0_25 = arith.constant 0 : index
    %42 = vector.load %arg6[%c0_24, %c0_25] : memref<8x1xf32, #tpu.memory_space<vmem>>, vector<8x1xf32>
    %43 = vector.broadcast %42 : vector<8x1xf32> to vector<8x384xf32>
    %44 = arith.addf %41, %43 : vector<8x384xf32>
    %45 = arith.truncf %44 : vector<8x384xf32> to vector<8x384xbf16>
    %c0_26 = arith.constant 0 : index
    %c0_27 = arith.constant 0 : index
    %c0_28 = arith.constant 0 : index
    %46 = vector.load %arg7[%c0_26, %c0_27, %c0_28] : memref<1x8x384xbf16, #tpu.memory_space<vmem>>, vector<1x8x384xbf16>
    %47 = vector.shape_cast %46 : vector<1x8x384xbf16> to vector<8x384xbf16>
    %48 = vector.shape_cast %45 : vector<8x384xbf16> to vector<1x8x384xbf16>
    tpu.vector_store %arg7[%c0_26, %c0_27, %c0_28], %48 {strides = array<i32>} : memref<1x8x384xbf16, #tpu.memory_space<vmem>>, vector<1x8x384xbf16>,
    %c0_29 = arith.constant 0 : index
    %c0_30 = arith.constant 0 : index
    %49 = vector.load %arg4[%c0_29, %c0_30] : memref<1x384xf32, #tpu.memory_space<vmem>>, vector<1x384xf32>
    %50 = vector.broadcast %49 : vector<1x384xf32> to vector<8x384xf32>
    %51 = arith.mulf %41, %50 : vector<8x384xf32>
    %cst_31 = arith.constant dense<0.000000e+00> : vector<8xf32>
    %52 = vector.multi_reduction <add>, %51, %cst_31 [1] : vector<8x384xf32> to vector<8xf32>
    %53 = vector.shape_cast %52 : vector<8xf32> to vector<8x1xf32>
    %54 = arith.mulf %51, %51 : vector<8x384xf32>
    %cst_32 = arith.constant dense<0.000000e+00> : vector<8xf32>
    %55 = vector.multi_reduction <add>, %54, %cst_32 [1] : vector<8x384xf32> to vector<8xf32>
    %56 = vector.shape_cast %55 : vector<8xf32> to vector<8x1xf32>
    %57 = tpu.concatenate %53, %56 in 1 : vector<8x1xf32>, vector<8x1xf32> -> vector<8x2xf32>
    %c0_33 = arith.constant 0 : index
    %c0_34 = arith.constant 0 : index
    %c0_35 = arith.constant 0 : index
    %c0_36 = arith.constant 0 : index
    %58 = vector.load %arg8[%c0_33, %c0_34, %c0_35, %c0_36] : memref<1x1x8x2xf32, #tpu.memory_space<vmem>>, vector<1x1x8x2xf32>
    %59 = vector.shape_cast %58 : vector<1x1x8x2xf32> to vector<8x2xf32>
    %60 = vector.shape_cast %57 : vector<8x2xf32> to vector<1x1x8x2xf32>
    tpu.vector_store %arg8[%c0_33, %c0_34, %c0_35, %c0_36], %60 {strides = array<i32>} : memref<1x1x8x2xf32, #tpu.memory_space<vmem>>, vector<1x1x8x2xf32>,
    return
  }
  func.func @transform_0(%arg0: i32, %arg1: i32) -> (i32, i32, i32) {
    %c0_i32 = arith.constant 0 : i32
    %c0_i32_0 = arith.constant 0 : i32
    return %arg0, %c0_i32, %arg1 : i32, i32, i32
  }
  func.func @transform_1(%arg0: i32, %arg1: i32) -> (i32, i32, i32) {
    %c1_i32 = arith.constant 1 : i32
    %0 = arith.addi %arg1, %c1_i32 : i32
    %c3_i32 = arith.constant 3 : i32
    %1 = arith.muli %0, %c3_i32 : i32
    %c0_i32 = arith.constant 0 : i32
    %c0_i32_0 = arith.constant 0 : i32
    return %arg0, %c0_i32, %1 : i32, i32, i32
  }
  func.func @transform_2(%arg0: i32, %arg1: i32) -> (i32, i32) {
    %c0_i32 = arith.constant 0 : i32
    %c0_i32_0 = arith.constant 0 : i32
    return %c0_i32, %arg1 : i32, i32
  }
  func.func @transform_3(%arg0: i32, %arg1: i32) -> (i32, i32) {
    %c0_i32 = arith.constant 0 : i32
    %c0_i32_0 = arith.constant 0 : i32
    %c0_i32_1 = arith.constant 0 : i32
    return %c0_i32, %c0_i32_0 : i32, i32
  }
  func.func @transform_4(%arg0: i32, %arg1: i32) -> (i32, i32) {
    %c0_i32 = arith.constant 0 : i32
    %c0_i32_0 = arith.constant 0 : i32
    %c0_i32_1 = arith.constant 0 : i32
    return %c0_i32, %c0_i32_0 : i32, i32
  }
  func.func @transform_5(%arg0: i32, %arg1: i32) -> (i32, i32, i32) {
    %c0_i32 = arith.constant 0 : i32
    %c0_i32_0 = arith.constant 0 : i32
    return %arg0, %c0_i32, %arg1 : i32, i32, i32
  }
  func.func @transform_6(%arg0: i32, %arg1: i32) -> (i32, i32, i32, i32) {
    %c0_i32 = arith.constant 0 : i32
    %c0_i32_0 = arith.constant 0 : i32
    %c0_i32_1 = arith.constant 0 : i32
    return %arg0, %arg1, %c0_i32, %c0_i32_0 : i32, i32, i32, i32
  }
}

</mosaic_0001>

<llo_original>
// kernel: convolutional_block.3
$region0: #{convolutional_block.3}
  #allocation0 [shape = 'u32[]', space=smem, size = 0x4, offset = 0x4, fixed_abs, tag = 'smem constant byte address 0x4 - core index']
  #allocation1 [shape = 'u32[72,128]{1,0:T(1,128)}', space=vmem, size = 0x9000, scoped, tag = 'internal scratch']
  #allocation2 [shape = 'f32[1]{0:T(128)S(6)}', space=smem, size = 0x200, scoped, tag = 'scoped memory for convolutional_block.3']
  %s0 = inlined_call_operand.vmem [shape: bf16[2,8,384], index: 0, kind: input, shape index: {}]
  %s1 = inlined_call_operand.vmem [shape: f32[8,1], index: 1, kind: input, shape index: {}]
  %s2 = inlined_call_operand.vmem [shape: f32[8,1], index: 2, kind: input, shape index: {}]
  %s3 = inlined_call_operand.<no memory space> [shape: f32[1], index: 3, kind: input, shape index: {}]
  %s4 = inlined_call_operand.vmem [shape: f32[2,8,384], index: 4, kind: output, shape index: {}]
  %s5 = sld [smem:[#allocation0]]
  $region49: #{convolutional_block.3} parent=0
    _
  %s7 = ssub.s32 1, %s5
  %s8 = scalar_select 0, %s7, %s5
  %9 = sst [smem:[#allocation2]] %s3
  loop: start=0, step=1, limit=4
  $region2: #{convolutional_block.3} parent=0 // loop_pre_header
    _
  $region3: #{convolutional_block.3} parent=0 // loop_header
    %s11 = sphi 0, %s15
    %p12 = scmp.ge.s32.totalorder %s11, 4
    %s18 = sphi 0, %s30
    %s19 = sphi 0, %s26
    %s20 = sphi 0, %s18
    %s21 = sphi 0, %s19
    %s22 = sphi 0, %s20
    %s23 = sphi 0, %s21
    %s35 = sphi 0, %s37
    %s38 = sphi 0, %s35
    %s39 = sphi 0, %s38
    %s55 = sphi 0, %s39
    %s59 = sphi 0, %s59
    %s61 = sphi 0, %s59
    %s62 = sphi 0, %s61
    %s76 = sphi 0, %s62
    %s80 = sphi 0, %s80
    %s82 = sphi 0, %s80
    %s83 = sphi 0, %s82
    %s97 = sphi 0, %s83
    %s101 = sphi 0, %s101
    %s103 = sphi 0, %s101
    %s104 = sphi 0, %s103
    %s118 = sphi 0, %s104
    %s126 = sphi 0, %s128
    %s129 = sphi 0, %s126
    %s130 = sphi 0, %s129
    %s146 = sphi 0, %s130
  $region4: #{convolutional_block.3} parent=0 // loop_header_branch
    %14 = sbr.rel (%p12) target = $region8
  $region5: #{convolutional_block.3} parent=0 // loop_body
    %s16 = ssub.s32 %s11, 1
    %s17 = ssub.s32 %s11, 2
    %s24 = sadd.s32 1, %s19
    %p25 = scmp.ge.s32.totalorder %s24, 1
    %s26 = scalar_select %p25, 0, %s24
    %s27 = sadd.s32 1, %s18
    %s28 = scalar_select %p25, %s27, %s18
    %p29 = scmp.ge.s32.totalorder %s28, 2
    %s30 = scalar_select %p29, 0, %s28
    %s31 = ssub.s32 %s18, %s30
    %s32 = ssub.s32 %s19, %s26
    %s33 = sor.u32 %s31, %s32
    %p34 = scmp.eq.s32.totalorder %s33, 0
    %s36 = sadd.s32 %s35, 1
    %s37 = scalar_select %p34, %s35, %s36
    %p40 = pneg %p34
    %p41 = scmp.eq.s32.totalorder %s11, 1
    %p42 = por %p40, %p41
    %p43 = scmp.ne.s32.totalorder %s35, %s38
    %p44 = scmp.eq.s32.totalorder %s11, 0
    %p45 = por %p43, %p44
    %p46 = scmp.ne.s32.totalorder %s35, %s38
    %p47 = scmp.eq.s32.totalorder %s16, 1
    %p48 = por %p46, %p47
    %p49 = scmp.ne.s32.totalorder %s38, %s39
    %p50 = scmp.eq.s32.totalorder %s16, 0
    %p51 = por %p49, %p50
    %p52 = scmp.ne.s32.totalorder %s38, %s39
    %p53 = scmp.eq.s32.totalorder %s17, 1
    %p54 = por %p52, %p53
    %p56 = scmp.ne.s32.totalorder %s39, %s55
    %p57 = scmp.eq.s32.totalorder %s17, 0
    %p58 = por %p56, %p57
    %s60 = sadd.s32 %s59, 1
    %p63 = scmp.eq.s32.totalorder %s11, 1
    %p64 = scmp.ne.s32.totalorder %s59, %s61
    %p65 = scmp.eq.s32.totalorder %s11, 0
    %p66 = por %p64, %p65
    %p67 = scmp.ne.s32.totalorder %s59, %s61
    %p68 = scmp.eq.s32.totalorder %s16, 1
    %p69 = por %p67, %p68
    %p70 = scmp.ne.s32.totalorder %s61, %s62
    %p71 = scmp.eq.s32.totalorder %s16, 0
    %p72 = por %p70, %p71
    %p73 = scmp.ne.s32.totalorder %s61, %s62
    %p74 = scmp.eq.s32.totalorder %s17, 1
    %p75 = por %p73, %p74
    %p77 = scmp.ne.s32.totalorder %s62, %s76
    %p78 = scmp.eq.s32.totalorder %s17, 0
    %p79 = por %p77, %p78
    %s81 = sadd.s32 %s80, 1
    %p84 = scmp.eq.s32.totalorder %s11, 1
    %p85 = scmp.ne.s32.totalorder %s80, %s82
    %p86 = scmp.eq.s32.totalorder %s11, 0
    %p87 = por %p85, %p86
    %p88 = scmp.ne.s32.totalorder %s80, %s82
    %p89 = scmp.eq.s32.totalorder %s16, 1
    %p90 = por %p88, %p89
    %p91 = scmp.ne.s32.totalorder %s82, %s83
    %p92 = scmp.eq.s32.totalorder %s16, 0
    %p93 = por %p91, %p92
    %p94 = scmp.ne.s32.totalorder %s82, %s83
    %p95 = scmp.eq.s32.totalorder %s17, 1
    %p96 = por %p94, %p95
    %p98 = scmp.ne.s32.totalorder %s83, %s97
    %p99 = scmp.eq.s32.totalorder %s17, 0
    %p100 = por %p98, %p99
    %s102 = sadd.s32 %s101, 1
    %p105 = scmp.eq.s32.totalorder %s11, 1
    %p106 = scmp.ne.s32.totalorder %s101, %s103
    %p107 = scmp.eq.s32.totalorder %s11, 0
    %p108 = por %p106, %p107
    %p109 = scmp.ne.s32.totalorder %s101, %s103
    %p110 = scmp.eq.s32.totalorder %s16, 1
    %p111 = por %p109, %p110
    %p112 = scmp.ne.s32.totalorder %s103, %s104
    %p113 = scmp.eq.s32.totalorder %s16, 0
    %p114 = por %p112, %p113
    %p115 = scmp.ne.s32.totalorder %s103, %s104
    %p116 = scmp.eq.s32.totalorder %s17, 1
    %p117 = por %p115, %p116
    %p119 = scmp.ne.s32.totalorder %s104, %s118
    %p120 = scmp.eq.s32.totalorder %s17, 0
    %p121 = por %p119, %p120
    %s122 = ssub.s32 %s18, %s30
    %s123 = ssub.s32 %s19, %s26
    %s124 = sor.u32 %s122, %s123
    %p125 = scmp.eq.s32.totalorder %s124, 0
    %s127 = sadd.s32 %s126, 1
    %s128 = scalar_select %p125, %s126, %s127
    %p131 = pneg %p125
    %p132 = scmp.eq.s32.totalorder %s11, 1
    %p133 = por %p131, %p132
    %p134 = scmp.ne.s32.totalorder %s126, %s129
    %p135 = scmp.eq.s32.totalorder %s11, 0
    %p136 = por %p134, %p135
    %p137 = scmp.ne.s32.totalorder %s126, %s129
    %p138 = scmp.eq.s32.totalorder %s16, 1
    %p139 = por %p137, %p138
    %p140 = scmp.ne.s32.totalorder %s129, %s130
    %p141 = scmp.eq.s32.totalorder %s16, 0
    %p142 = por %p140, %p141
    %p143 = scmp.ne.s32.totalorder %s129, %s130
    %p144 = scmp.eq.s32.totalorder %s17, 1
    %p145 = por %p143, %p144
    %p147 = scmp.ne.s32.totalorder %s130, %s146
    %p148 = scmp.eq.s32.totalorder %s17, 0
    %p149 = por %p147, %p148
    %p150 = scmp.le.s32.totalorder 1, %s11
    %p151 = scmp.lt.s32.totalorder %s11, 3
    %p152 = pnand %p150, %p151
    %p153 = pneg %p152
    // Predicated region
    $region9: #{convolutional_block.3} parent=5 // pred_check
      _
    $region10: #{convolutional_block.3} parent=5 // pred_check_branch
      %155 = sbr.rel (%p152) target = $region12
    $region11: #{convolutional_block.3} parent=5 // pred_region
      %s156 = ssub.s32 %s11, 1
      // Predicated region
      $region13: #{convolutional_block.3} parent=11 // pred_check
        %p157 = pneg %p72
      $region14: #{convolutional_block.3} parent=11 // pred_check_branch
        %159 = sbr.rel (%p157) target = $region16
      $region15: #{convolutional_block.3} parent=11 // pred_region
        _
      $region16: #{convolutional_block.3} parent=11 // pred_fallthru
        _
      // Predicated region
      $region17: #{convolutional_block.3} parent=11 // pred_check
        %p160 = pneg %p93
      $region18: #{convolutional_block.3} parent=11 // pred_check_branch
        %162 = sbr.rel (%p160) target = $region20
      $region19: #{convolutional_block.3} parent=11 // pred_region
        _
      $region20: #{convolutional_block.3} parent=11 // pred_fallthru
        _
      // Predicated region
      $region21: #{convolutional_block.3} parent=11 // pred_check
        %p163 = pneg %p114
      $region22: #{convolutional_block.3} parent=11 // pred_check_branch
        %165 = sbr.rel (%p163) target = $region24
      $region23: #{convolutional_block.3} parent=11 // pred_region
        _
      $region24: #{convolutional_block.3} parent=11 // pred_fallthru
        _
    $region12: #{convolutional_block.3} parent=5 // pred_fallthru
      _
    %p166 = scmp.lt.s32.totalorder %s11, 2
    // Predicated region
    $region25: #{convolutional_block.3} parent=5 // pred_check
      %p167 = pneg %p166
    $region26: #{convolutional_block.3} parent=5 // pred_check_branch
      %169 = sbr.rel (%p167) target = $region28
    $region27: #{convolutional_block.3} parent=5 // pred_region
      // Predicated region
      $region29: #{convolutional_block.3} parent=27 // pred_check
        %p170 = pneg %p45
      $region30: #{convolutional_block.3} parent=27 // pred_check_branch
        %172 = sbr.rel (%p170) target = $region32
      $region31: #{convolutional_block.3} parent=27 // pred_region
        %s173 = smul.u32 3, %s19
        %p174 = scmp.lt.s32.totalorder %s18, 1
        %s175 = scalar_select %p174, %s18, 1
        %p176 = scmp.lt.s32.totalorder %s173, 2
        %s177 = scalar_select %p176, %s173, 2
        %s178 = smul.addr %s175, 3
        %s179 = sadd.s32 %s177, %s178
        %s180 = smul.addr %s179, 4
        %s181 = scalar_lea.vmem %s0, %s180
        %s182 = smul.u32 3, %s19
      $region32: #{convolutional_block.3} parent=27 // pred_fallthru
        _
    $region28: #{convolutional_block.3} parent=5 // pred_fallthru
      _
    %p183 = scmp.le.s32.totalorder 1, %s11
    %p184 = scmp.lt.s32.totalorder %s11, 3
    %p185 = pnand %p183, %p184
    %p186 = pneg %p185
    // Predicated region
    $region33: #{convolutional_block.3} parent=5 // pred_check
      _
    $region34: #{convolutional_block.3} parent=5 // pred_check_branch
      %188 = sbr.rel (%p185) target = $region36
    $region35: #{convolutional_block.3} parent=5 // pred_region
      %s189 = ssub.s32 %s11, 1
      %s190 = smul.u32 3, %s21
      %p191 = scmp.lt.s32.totalorder %s20, 1
      %s192 = scalar_select %p191, %s20, 1
      %p193 = scmp.lt.s32.totalorder %s190, 2
      %s194 = scalar_select %p193, %s190, 2
      %s195 = smul.addr %s192, 3
      %s196 = sadd.s32 %s194, %s195
      %s197 = smul.addr %s196, 4
      %s198 = scalar_lea.vmem %s0, %s197
      %p199 = pneg %p51
      %p200 = pneg %p48
      %p201 = pneg %p72
      %p202 = pneg %p69
      %p203 = pneg %p93
      %p204 = pneg %p90
      %p205 = pneg %p114
      %p206 = pneg %p111
      %p207 = pneg %p142
      %p208 = pneg %p139
      %s209 = smul.u32 3, %s21
      %p210 = scmp.lt.s32.totalorder %s20, 1
      %s211 = scalar_select %p210, %s20, 1
      %p212 = scmp.lt.s32.totalorder %s209, 2
      %s213 = scalar_select %p212, %s209, 2
      %s214 = smul.addr %s211, 3
      %s215 = sadd.s32 %s213, %s214
      %s216 = smul.addr %s215, 8
      %s217 = scalar_lea.vmem %s4, %s216
      %s218 = smul.u32 3, %s21
      %p219 = scmp.lt.s32.totalorder %s20, 1
      %s220 = scalar_select %p219, %s20, 1
      %p221 = scmp.lt.s32.totalorder %s218, 2
      %s222 = scalar_select %p221, %s218, 2
      %s223 = smul.addr %s220, 3
      %s224 = sadd.s32 %s222, %s223
      %s225 = smul.addr %s224, 4
      %s226 = scalar_lea.vmem %s0, %s225
      %s227 = smul.u32 3, %s21
      %s228 = smul.u32 3, %s21
      %p229 = scmp.lt.s32.totalorder %s20, 1
      %s230 = scalar_select %p229, %s20, 1
      %p231 = scmp.lt.s32.totalorder %s228, 2
      %s232 = scalar_select %p231, %s228, 2
      %s233 = smul.addr %s230, 3
      %s234 = sadd.s32 %s232, %s233
      %s235 = smul.addr %s234, 8
      %s236 = scalar_lea.vmem %s4, %s235
      %s237 = smul.u32 3, %s21
      %v238 = vld [vmem:[%s226] sm:$0xff]
      %v239 = vld [vmem:[%s226 + $0x8] sm:$0xf]
      %v240 = vunpack.c.l.bf16 %v238
      %v241 = vunpack.c.h.bf16 %v238
      %v242 = vunpack.c.l.bf16 %v239
      %v243 = vld [vmem:[%s1] sm:$0xff]
      %245 = vset.pattern.permute.xlu0 0
      %246 = vperm.xlu0 %245, %v243
      %v247 = vpop.permute.xlu0 %246
      %v249 = vmul.f32 %v240, %v247
      %v250 = vmul.f32 %v241, %v247
      %v251 = vmul.f32 %v242, %v247
      %v252 = vld [vmem:[%s2] sm:$0xff]
      %254 = vset.pattern.permute.xlu0 0
      %255 = vperm.xlu0 %254, %v252
      %v256 = vpop.permute.xlu0 %255
      %v258 = vadd.f32 %v249, %v256
      %v259 = vadd.f32 %v250, %v256
      %v260 = vadd.f32 %v251, %v256
      %vm261 = vcmp.ge.f32.partialorder %v258, 0.0
      %vm262 = vcmp.ge.f32.partialorder %v259, 0.0
      %vm263 = vcmp.ge.f32.partialorder %v260, 0.0
      %s264 = sld [smem:[#allocation2]]
      %v265 = vstv %s264
      %v266 = vmul.f32 %v265, %v258
      %v267 = vmul.f32 %v265, %v259
      %v268 = vmul.f32 %v265, %v260
      %v269 = vsel %vm261, %v258, %v266
      %v270 = vsel %vm262, %v259, %v267
      %v271 = vsel %vm263, %v260, %v268
      %272 = vst [vmem:[%s236] sm:$0xff] %v269
      %273 = vst [vmem:[%s236 + $0x8] sm:$0xff] %v270
      %274 = vst [vmem:[%s236 + $0x10] sm:$0xff] %v271
      %s275 = smul.u32 3, %s21
      %p276 = scmp.lt.s32.totalorder %s20, 1
      %s277 = scalar_select %p276, %s20, 1
      %p278 = scmp.lt.s32.totalorder %s275, 2
      %s279 = scalar_select %p278, %s275, 2
      %s280 = smul.addr %s277, 3
      %s281 = sadd.s32 %s279, %s280
      %s282 = smul.addr %s281, 8
      %s283 = scalar_lea.vmem %s4, %s282
      // Predicated region
      $region37: #{convolutional_block.3} parent=35 // pred_check
        %p284 = pneg %p139
      $region38: #{convolutional_block.3} parent=35 // pred_check_branch
        %286 = sbr.rel (%p284) target = $region40
      $region39: #{convolutional_block.3} parent=35 // pred_region
        %s287 = smul.u32 3, %s21
      $region40: #{convolutional_block.3} parent=35 // pred_fallthru
        _
    $region36: #{convolutional_block.3} parent=5 // pred_fallthru
      _
    %p288 = scmp.le.s32.totalorder 2, %s11
    // Predicated region
    $region41: #{convolutional_block.3} parent=5 // pred_check
      %p289 = pneg %p288
    $region42: #{convolutional_block.3} parent=5 // pred_check_branch
      %291 = sbr.rel (%p289) target = $region44
    $region43: #{convolutional_block.3} parent=5 // pred_region
      %s292 = ssub.s32 %s11, 2
      // Predicated region
      $region45: #{convolutional_block.3} parent=43 // pred_check
        %p293 = pneg %p145
      $region46: #{convolutional_block.3} parent=43 // pred_check_branch
        %295 = sbr.rel (%p293) target = $region48
      $region47: #{convolutional_block.3} parent=43 // pred_region
        %s296 = smul.u32 3, %s23
        %p297 = scmp.lt.s32.totalorder %s22, 1
        %s298 = scalar_select %p297, %s22, 1
        %p299 = scmp.lt.s32.totalorder %s296, 2
        %s300 = scalar_select %p299, %s296, 2
        %s301 = smul.addr %s298, 3
        %s302 = sadd.s32 %s300, %s301
        %s303 = smul.addr %s302, 8
        %s304 = scalar_lea.vmem %s4, %s303
      $region48: #{convolutional_block.3} parent=43 // pred_fallthru
        _
    $region44: #{convolutional_block.3} parent=5 // pred_fallthru
      _
  $region6: #{convolutional_block.3} parent=0 // loop_footer
    %s15 = sadd.s32 1, %s11
  $region7: #{convolutional_block.3} parent=0 // loop_footer_branch
    %10 = sbr.rel target = $region3
  $region8: #{convolutional_block.3} parent=0 // loop_exit
    _

// kernel: convolutional_block.2
$region0: #{convolutional_block.2}
  #allocation0 [shape = 'u32[]', space=smem, size = 0x4, offset = 0x4, fixed_abs, tag = 'smem constant byte address 0x4 - core index']
  #allocation1 [shape = 'u32[72,128]{1,0:T(1,128)}', space=vmem, size = 0x9000, scoped, tag = 'internal scratch']
  %s0 = inlined_call_operand.vmem [shape: bf16[2,4,512], index: 0, kind: input, shape index: {}, may-alias: {0,1}]
  %s1 = inlined_call_operand.vmem [shape: bf16[2,4,512], index: 1, kind: input, shape index: {}, may-alias: {0,1}]
  %s2 = inlined_call_operand.vmem [shape: f32[1,384], index: 2, kind: input, shape index: {}]
  %s3 = inlined_call_operand.vmem [shape: bf16[8,36], index: 3, kind: input, shape index: {}]
  %s4 = inlined_call_operand.vmem [shape: f32[8,1], index: 4, kind: input, shape index: {}]
  %s5 = inlined_call_operand.vmem [shape: bf16[2,8,384], index: 5, kind: output, shape index: {0}]
  %s6 = inlined_call_operand.vmem [shape: f32[2,1,8,2], index: 6, kind: output, shape index: {1}]
  %7 = xla_tuple %s5, %s6
  %s8 = sld [smem:[#allocation0]]
  $region61: #{convolutional_block.2} parent=0
    _
  %s10 = ssub.s32 1, %s8
  %s11 = scalar_select 0, %s10, %s8
  loop: start=0, step=1, limit=4
  $region2: #{convolutional_block.2} parent=0 // loop_pre_header
    _
  $region3: #{convolutional_block.2} parent=0 // loop_header
    %s13 = sphi 0, %s17
    %p14 = scmp.ge.s32.totalorder %s13, 4
    %s20 = sphi 0, %s32
    %s21 = sphi 0, %s28
    %s22 = sphi 0, %s20
    %s23 = sphi 0, %s21
    %s24 = sphi 0, %s22
    %s25 = sphi 0, %s23
    %s37 = sphi 0, %s39
    %s40 = sphi 0, %s37
    %s41 = sphi 0, %s40
    %s57 = sphi 0, %s41
    %s69 = sphi 0, %s71
    %s72 = sphi 0, %s69
    %s73 = sphi 0, %s72
    %s89 = sphi 0, %s73
    %s95 = sphi 0, %s97
    %s98 = sphi 0, %s95
    %s99 = sphi 0, %s98
    %s115 = sphi 0, %s99
    %s119 = sphi 0, %s119
    %s121 = sphi 0, %s119
    %s122 = sphi 0, %s121
    %s136 = sphi 0, %s122
    %s140 = sphi 0, %s140
    %s142 = sphi 0, %s140
    %s143 = sphi 0, %s142
    %s157 = sphi 0, %s143
    %s165 = sphi 0, %s167
    %s168 = sphi 0, %s165
    %s169 = sphi 0, %s168
    %s185 = sphi 0, %s169
    %s193 = sphi 0, %s195
    %s196 = sphi 0, %s193
    %s197 = sphi 0, %s196
    %s213 = sphi 0, %s197
  $region4: #{convolutional_block.2} parent=0 // loop_header_branch
    %16 = sbr.rel (%p14) target = $region8
  $region5: #{convolutional_block.2} parent=0 // loop_body
    %s18 = ssub.s32 %s13, 1
    %s19 = ssub.s32 %s13, 2
    %s26 = sadd.s32 1, %s21
    %p27 = scmp.ge.s32.totalorder %s26, 1
    %s28 = scalar_select %p27, 0, %s26
    %s29 = sadd.s32 1, %s20
    %s30 = scalar_select %p27, %s29, %s20
    %p31 = scmp.ge.s32.totalorder %s30, 2
    %s32 = scalar_select %p31, 0, %s30
    %s33 = ssub.s32 %s20, %s32
    %s34 = ssub.s32 %s21, %s28
    %s35 = sor.u32 %s33, %s34
    %p36 = scmp.eq.s32.totalorder %s35, 0
    %s38 = sadd.s32 %s37, 1
    %s39 = scalar_select %p36, %s37, %s38
    %p42 = pneg %p36
    %p43 = scmp.eq.s32.totalorder %s13, 1
    %p44 = por %p42, %p43
    %p45 = scmp.ne.s32.totalorder %s37, %s40
    %p46 = scmp.eq.s32.totalorder %s13, 0
    %p47 = por %p45, %p46
    %p48 = scmp.ne.s32.totalorder %s37, %s40
    %p49 = scmp.eq.s32.totalorder %s18, 1
    %p50 = por %p48, %p49
    %p51 = scmp.ne.s32.totalorder %s40, %s41
    %p52 = scmp.eq.s32.totalorder %s18, 0
    %p53 = por %p51, %p52
    %p54 = scmp.ne.s32.totalorder %s40, %s41
    %p55 = scmp.eq.s32.totalorder %s19, 1
    %p56 = por %p54, %p55
    %p58 = scmp.ne.s32.totalorder %s41, %s57
    %p59 = scmp.eq.s32.totalorder %s19, 0
    %p60 = por %p58, %p59
    %s61 = sadd.s32 %s21, 1
    %s62 = smul.u32 %s61, 3
    %s63 = sadd.s32 %s28, 1
    %s64 = smul.u32 %s63, 3
    %s65 = ssub.s32 %s20, %s32
    %s66 = ssub.s32 %s62, %s64
    %s67 = sor.u32 %s65, %s66
    %p68 = scmp.eq.s32.totalorder %s67, 0
    %s70 = sadd.s32 %s69, 1
    %s71 = scalar_select %p68, %s69, %s70
    %p74 = pneg %p68
    %p75 = scmp.eq.s32.totalorder %s13, 1
    %p76 = por %p74, %p75
    %p77 = scmp.ne.s32.totalorder %s69, %s72
    %p78 = scmp.eq.s32.totalorder %s13, 0
    %p79 = por %p77, %p78
    %p80 = scmp.ne.s32.totalorder %s69, %s72
    %p81 = scmp.eq.s32.totalorder %s18, 1
    %p82 = por %p80, %p81
    %p83 = scmp.ne.s32.totalorder %s72, %s73
    %p84 = scmp.eq.s32.totalorder %s18, 0
    %p85 = por %p83, %p84
    %p86 = scmp.ne.s32.totalorder %s72, %s73
    %p87 = scmp.eq.s32.totalorder %s19, 1
    %p88 = por %p86, %p87
    %p90 = scmp.ne.s32.totalorder %s73, %s89
    %p91 = scmp.eq.s32.totalorder %s19, 0
    %p92 = por %p90, %p91
    %s93 = ssub.s32 %s21, %s28
    %p94 = scmp.eq.s32.totalorder %s93, 0
    %s96 = sadd.s32 %s95, 1
    %s97 = scalar_select %p94, %s95, %s96
    %p100 = pneg %p94
    %p101 = scmp.eq.s32.totalorder %s13, 1
    %p102 = por %p100, %p101
    %p103 = scmp.ne.s32.totalorder %s95, %s98
    %p104 = scmp.eq.s32.totalorder %s13, 0
    %p105 = por %p103, %p104
    %p106 = scmp.ne.s32.totalorder %s95, %s98
    %p107 = scmp.eq.s32.totalorder %s18, 1
    %p108 = por %p106, %p107
    %p109 = scmp.ne.s32.totalorder %s98, %s99
    %p110 = scmp.eq.s32.totalorder %s18, 0
    %p111 = por %p109, %p110
    %p112 = scmp.ne.s32.totalorder %s98, %s99
    %p113 = scmp.eq.s32.totalorder %s19, 1
    %p114 = por %p112, %p113
    %p116 = scmp.ne.s32.totalorder %s99, %s115
    %p117 = scmp.eq.s32.totalorder %s19, 0
    %p118 = por %p116, %p117
    %s120 = sadd.s32 %s119, 1
    %p123 = scmp.eq.s32.totalorder %s13, 1
    %p124 = scmp.ne.s32.totalorder %s119, %s121
    %p125 = scmp.eq.s32.totalorder %s13, 0
    %p126 = por %p124, %p125
    %p127 = scmp.ne.s32.totalorder %s119, %s121
    %p128 = scmp.eq.s32.totalorder %s18, 1
    %p129 = por %p127, %p128
    %p130 = scmp.ne.s32.totalorder %s121, %s122
    %p131 = scmp.eq.s32.totalorder %s18, 0
    %p132 = por %p130, %p131
    %p133 = scmp.ne.s32.totalorder %s121, %s122
    %p134 = scmp.eq.s32.totalorder %s19, 1
    %p135 = por %p133, %p134
    %p137 = scmp.ne.s32.totalorder %s122, %s136
    %p138 = scmp.eq.s32.totalorder %s19, 0
    %p139 = por %p137, %p138
    %s141 = sadd.s32 %s140, 1
    %p144 = scmp.eq.s32.totalorder %s13, 1
    %p145 = scmp.ne.s32.totalorder %s140, %s142
    %p146 = scmp.eq.s32.totalorder %s13, 0
    %p147 = por %p145, %p146
    %p148 = scmp.ne.s32.totalorder %s140, %s142
    %p149 = scmp.eq.s32.totalorder %s18, 1
    %p150 = por %p148, %p149
    %p151 = scmp.ne.s32.totalorder %s142, %s143
    %p152 = scmp.eq.s32.totalorder %s18, 0
    %p153 = por %p151, %p152
    %p154 = scmp.ne.s32.totalorder %s142, %s143
    %p155 = scmp.eq.s32.totalorder %s19, 1
    %p156 = por %p154, %p155
    %p158 = scmp.ne.s32.totalorder %s143, %s157
    %p159 = scmp.eq.s32.totalorder %s19, 0
    %p160 = por %p158, %p159
    %s161 = ssub.s32 %s20, %s32
    %s162 = ssub.s32 %s21, %s28
    %s163 = sor.u32 %s161, %s162
    %p164 = scmp.eq.s32.totalorder %s163, 0
    %s166 = sadd.s32 %s165, 1
    %s167 = scalar_select %p164, %s165, %s166
    %p170 = pneg %p164
    %p171 = scmp.eq.s32.totalorder %s13, 1
    %p172 = por %p170, %p171
    %p173 = scmp.ne.s32.totalorder %s165, %s168
    %p174 = scmp.eq.s32.totalorder %s13, 0
    %p175 = por %p173, %p174
    %p176 = scmp.ne.s32.totalorder %s165, %s168
    %p177 = scmp.eq.s32.totalorder %s18, 1
    %p178 = por %p176, %p177
    %p179 = scmp.ne.s32.totalorder %s168, %s169
    %p180 = scmp.eq.s32.totalorder %s18, 0
    %p181 = por %p179, %p180
    %p182 = scmp.ne.s32.totalorder %s168, %s169
    %p183 = scmp.eq.s32.totalorder %s19, 1
    %p184 = por %p182, %p183
    %p186 = scmp.ne.s32.totalorder %s169, %s185
    %p187 = scmp.eq.s32.totalorder %s19, 0
    %p188 = por %p186, %p187
    %s189 = ssub.s32 %s20, %s32
    %s190 = ssub.s32 %s21, %s28
    %s191 = sor.u32 %s189, %s190
    %p192 = scmp.eq.s32.totalorder %s191, 0
    %s194 = sadd.s32 %s193, 1
    %s195 = scalar_select %p192, %s193, %s194
    %p198 = pneg %p192
    %p199 = scmp.eq.s32.totalorder %s13, 1
    %p200 = por %p198, %p199
    %p201 = scmp.ne.s32.totalorder %s193, %s196
    %p202 = scmp.eq.s32.totalorder %s13, 0
    %p203 = por %p201, %p202
    %p204 = scmp.ne.s32.totalorder %s193, %s196
    %p205 = scmp.eq.s32.totalorder %s18, 1
    %p206 = por %p204, %p205
    %p207 = scmp.ne.s32.totalorder %s196, %s197
    %p208 = scmp.eq.s32.totalorder %s18, 0
    %p209 = por %p207, %p208
    %p210 = scmp.ne.s32.totalorder %s196, %s197
    %p211 = scmp.eq.s32.totalorder %s19, 1
    %p212 = por %p210, %p211
    %p214 = scmp.ne.s32.totalorder %s197, %s213
    %p215 = scmp.eq.s32.totalorder %s19, 0
    %p216 = por %p214, %p215
    %p217 = scmp.le.s32.totalorder 1, %s13
    %p218 = scmp.lt.s32.totalorder %s13, 3
    %p219 = pnand %p217, %p218
    %p220 = pneg %p219
    // Predicated region
    $region9: #{convolutional_block.2} parent=5 // pred_check
      _
    $region10: #{convolutional_block.2} parent=5 // pred_check_branch
      %222 = sbr.rel (%p219) target = $region12
    $region11: #{convolutional_block.2} parent=5 // pred_region
      %s223 = ssub.s32 %s13, 1
      // Predicated region
      $region13: #{convolutional_block.2} parent=11 // pred_check
        %p224 = pneg %p111
      $region14: #{convolutional_block.2} parent=11 // pred_check_branch
        %226 = sbr.rel (%p224) target = $region16
      $region15: #{convolutional_block.2} parent=11 // pred_region
        %s227 = smul.u32 3, %s23
        %p228 = scmp.lt.s32.totalorder %s227, 2
        %s229 = scalar_select %p228, %s227, 2
        %s230 = scalar_lea.vmem %s2, %s229
        %s231 = smul.u32 3, %s23
      $region16: #{convolutional_block.2} parent=11 // pred_fallthru
        _
      // Predicated region
      $region17: #{convolutional_block.2} parent=11 // pred_check
        %p232 = pneg %p132
      $region18: #{convolutional_block.2} parent=11 // pred_check_branch
        %234 = sbr.rel (%p232) target = $region20
      $region19: #{convolutional_block.2} parent=11 // pred_region
        _
      $region20: #{convolutional_block.2} parent=11 // pred_fallthru
        _
      // Predicated region
      $region21: #{convolutional_block.2} parent=11 // pred_check
        %p235 = pneg %p153
      $region22: #{convolutional_block.2} parent=11 // pred_check_branch
        %237 = sbr.rel (%p235) target = $region24
      $region23: #{convolutional_block.2} parent=11 // pred_region
        _
      $region24: #{convolutional_block.2} parent=11 // pred_fallthru
        _
    $region12: #{convolutional_block.2} parent=5 // pred_fallthru
      _
    %p238 = scmp.lt.s32.totalorder %s13, 2
    // Predicated region
    $region25: #{convolutional_block.2} parent=5 // pred_check
      %p239 = pneg %p238
    $region26: #{convolutional_block.2} parent=5 // pred_check_branch
      %241 = sbr.rel (%p239) target = $region28
    $region27: #{convolutional_block.2} parent=5 // pred_region
      // Predicated region
      $region29: #{convolutional_block.2} parent=27 // pred_check
        %p242 = pneg %p47
      $region30: #{convolutional_block.2} parent=27 // pred_check_branch
        %244 = sbr.rel (%p242) target = $region32
      $region31: #{convolutional_block.2} parent=27 // pred_region
        %s245 = smul.u32 3, %s21
        %s246 = ssub.s32 4, %s245
        %p247 = scmp.lt.s32.totalorder %s246, 3
        %s248 = scalar_select %p247, %s246, 3
        %s249 = smul.u32 2, %s248
        %p250 = scmp.lt.s32.totalorder %s20, 1
        %s251 = scalar_select %p250, %s20, 1
        %p252 = scmp.lt.s32.totalorder %s245, 3
        %s253 = scalar_select %p252, %s245, 3
        %s254 = smul.addr %s251, 4
        %s255 = sadd.s32 %s253, %s254
        %s256 = smul.addr %s255, 2
        %s257 = scalar_lea.vmem %s0, %s256
        %s258 = smul.u32 3, %s21
        %s259 = ssub.s32 4, %s258
        %p260 = scmp.lt.s32.totalorder %s259, 3
        %s261 = scalar_select %p260, %s259, 3
        %s262 = smul.u32 2, %s261
      $region32: #{convolutional_block.2} parent=27 // pred_fallthru
        _
      // Predicated region
      $region33: #{convolutional_block.2} parent=27 // pred_check
        %p263 = pneg %p79
      $region34: #{convolutional_block.2} parent=27 // pred_check_branch
        %265 = sbr.rel (%p263) target = $region36
      $region35: #{convolutional_block.2} parent=27 // pred_region
        %s266 = sadd.s32 %s21, 1
        %s267 = smul.u32 %s266, 3
        %p268 = scmp.lt.s32.totalorder %s20, 1
        %s269 = scalar_select %p268, %s20, 1
        %p270 = scmp.lt.s32.totalorder %s267, 3
        %s271 = scalar_select %p270, %s267, 3
        %s272 = smul.addr %s269, 4
        %s273 = sadd.s32 %s271, %s272
        %s274 = smul.addr %s273, 2
        %s275 = scalar_lea.vmem %s1, %s274
        %s276 = sadd.s32 %s21, 1
        %s277 = smul.u32 %s276, 3
      $region36: #{convolutional_block.2} parent=27 // pred_fallthru
        _
    $region28: #{convolutional_block.2} parent=5 // pred_fallthru
      _
    %p278 = scmp.le.s32.totalorder 1, %s13
    %p279 = scmp.lt.s32.totalorder %s13, 3
    %p280 = pnand %p278, %p279
    %p281 = pneg %p280
    // Predicated region
    $region37: #{convolutional_block.2} parent=5 // pred_check
      _
    $region38: #{convolutional_block.2} parent=5 // pred_check_branch
      %283 = sbr.rel (%p280) target = $region40
    $region39: #{convolutional_block.2} parent=5 // pred_region
      %s284 = ssub.s32 %s13, 1
      %s285 = smul.u32 3, %s23
      %s286 = ssub.s32 4, %s285
      %p287 = scmp.lt.s32.totalorder %s286, 3
      %s288 = scalar_select %p287, %s286, 3
      %s289 = smul.u32 2, %s288
      %p290 = scmp.lt.s32.totalorder %s22, 1
      %s291 = scalar_select %p290, %s22, 1
      %p292 = scmp.lt.s32.totalorder %s285, 3
      %s293 = scalar_select %p292, %s285, 3
      %s294 = smul.addr %s291, 4
      %s295 = sadd.s32 %s293, %s294
      %s296 = smul.addr %s295, 2
      %s297 = scalar_lea.vmem %s0, %s296
      %p298 = pneg %p53
      %p299 = pneg %p50
      %s300 = sadd.s32 %s23, 1
      %s301 = smul.u32 %s300, 3
      %p302 = scmp.lt.s32.totalorder %s22, 1
      %s303 = scalar_select %p302, %s22, 1
      %p304 = scmp.lt.s32.totalorder %s301, 3
      %s305 = scalar_select %p304, %s301, 3
      %s306 = smul.addr %s303, 4
      %s307 = sadd.s32 %s305, %s306
      %s308 = smul.addr %s307, 2
      %s309 = scalar_lea.vmem %s1, %s308
      %p310 = pneg %p85
      %p311 = pneg %p82
      %s312 = smul.u32 3, %s23
      %p313 = scmp.lt.s32.totalorder %s312, 2
      %s314 = scalar_select %p313, %s312, 2
      %s315 = scalar_lea.vmem %s2, %s314
      %p316 = pneg %p111
      %p317 = pneg %p108
      %p318 = pneg %p132
      %p319 = pneg %p129
      %p320 = pneg %p153
      %p321 = pneg %p150
      %p322 = pneg %p181
      %p323 = pneg %p178
      %s324 = smul.u32 3, %s23
      %p325 = scmp.lt.s32.totalorder %s22, 1
      %s326 = scalar_select %p325, %s22, 1
      %p327 = scmp.lt.s32.totalorder %s324, 2
      %s328 = scalar_select %p327, %s324, 2
      %s329 = smul.addr %s326, 3
      %s330 = sadd.s32 %s328, %s329
      %s331 = smul.addr %s330, 4
      %s332 = scalar_lea.vmem %s5, %s331
      %p333 = pneg %p209
      %p334 = pneg %p206
      %p335 = scmp.lt.s32.totalorder %s22, 1
      %s336 = scalar_select %p335, %s22, 1
      %p337 = scmp.lt.s32.totalorder %s23, 0
      %s338 = scalar_select %p337, %s23, 0
      %s339 = sadd.s32 %s338, %s336
      %s340 = smul.addr %s339, 8
      %s341 = scalar_lea.vmem %s6, %s340
      %s342 = smul.u32 3, %s23
      %s343 = ssub.s32 4, %s342
      %p344 = scmp.lt.s32.totalorder %s343, 3
      %s345 = scalar_select %p344, %s343, 3
      %s346 = smul.u32 2, %s345
      %p347 = scmp.lt.s32.totalorder %s22, 1
      %s348 = scalar_select %p347, %s22, 1
      %p349 = scmp.lt.s32.totalorder %s342, 3
      %s350 = scalar_select %p349, %s342, 3
      %s351 = smul.addr %s348, 4
      %s352 = sadd.s32 %s350, %s351
      %s353 = smul.addr %s352, 2
      %s354 = scalar_lea.vmem %s0, %s353
      %s355 = smul.u32 3, %s23
      %s356 = ssub.s32 4, %s355
      %p357 = scmp.lt.s32.totalorder %s356, 3
      %s358 = scalar_select %p357, %s356, 3
      %s359 = smul.u32 2, %s358
      %s360 = sadd.s32 %s23, 1
      %s361 = smul.u32 %s360, 3
      %p362 = scmp.lt.s32.totalorder %s22, 1
      %s363 = scalar_select %p362, %s22, 1
      %p364 = scmp.lt.s32.totalorder %s361, 3
      %s365 = scalar_select %p364, %s361, 3
      %s366 = smul.addr %s363, 4
      %s367 = sadd.s32 %s365, %s366
      %s368 = smul.addr %s367, 2
      %s369 = scalar_lea.vmem %s1, %s368
      %s370 = sadd.s32 %s23, 1
      %s371 = smul.u32 %s370, 3
      %s372 = smul.u32 3, %s23
      %p373 = scmp.lt.s32.totalorder %s372, 2
      %s374 = scalar_select %p373, %s372, 2
      %s375 = scalar_lea.vmem %s2, %s374
      %s376 = smul.u32 3, %s23
      %s377 = smul.u32 3, %s23
      %p378 = scmp.lt.s32.totalorder %s22, 1
      %s379 = scalar_select %p378, %s22, 1
      %p380 = scmp.lt.s32.totalorder %s377, 2
      %s381 = scalar_select %p380, %s377, 2
      %s382 = smul.addr %s379, 3
      %s383 = sadd.s32 %s381, %s382
      %s384 = smul.addr %s383, 4
      %s385 = scalar_lea.vmem %s5, %s384
      %s386 = smul.u32 3, %s23
      %p387 = scmp.lt.s32.totalorder %s22, 1
      %s388 = scalar_select %p387, %s22, 1
      %p389 = scmp.lt.s32.totalorder %s23, 0
      %s390 = scalar_select %p389, %s23, 0
      %s391 = sadd.s32 %s390, %s388
      %s392 = smul.addr %s391, 8
      %s393 = scalar_lea.vmem %s6, %s392
      %v395 = vld [vmem:[%s354] sm:$0x3f]
      %v396 = vld [vmem:[%s369] sm:$0x3]
      %398 = vst [vmem:[#allocation1] ss:$4 sm:$0xff] %v395
      %v399 = vld.sshfl [vmem:[#allocation1] sm:$0xff pattern:$0x73625140]
      %v401 = vld.sshfl [vmem:[#allocation1 + $0x8] sm:$0xff pattern:$0x73625140]
      %v403 = vld.sshfl [vmem:[#allocation1 + $0x10] sm:$0xff pattern:$0x73625140]
      %v405 = vld [vmem:[%s3] sm:$0xf]
      %v407 = vunpack.c.l.b16 %v405
      %v408 = vpack.c.b16 %v407, %v407
      %409 = vrot.lane.b32.xlu0 %v408, 124
      %v410 = vpop.permute.xlu0 %409
      %412 = vrot.lane.b32.xlu0 %v399, 127
      %v413 = vpop.permute.xlu0 %412
      %414 = vrot.lane.b32.xlu0 %v401, 127
      %v415 = vpop.permute.xlu0 %414
      %416 = vrot.lane.b32.xlu0 %v403, 127
      %v417 = vpop.permute.xlu0 %416
      %418 = vrot.lane.b32.xlu0 %v396, 127
      %v419 = vpop.permute.xlu0 %418
      %vm420 = vcmask 1039360
      %v421 = vsel %vm420, %v413, %v415
      %v422 = vsel %vm420, %v415, %v417
      %v423 = vsel %vm420, %v417, %v419
      %vm424 = vcmask 31744
      %v426 = vsel %vm424, %v410, 0
      %vm428 = vcmask 1041408
      %v430 = vsel %vm428, %v421, 0
      %v433 = vsel %vm428, %v422, 0
      %v436 = vsel %vm428, %v423, 0
      %438 = vmatpush.bf16.msra.mxu0 0
      %439 = vmatpush.bf16.msra.mxu0 0
      %440 = vmatpush.bf16.msra.mxu0 0
      %441 = vmatpush.bf16.msra.mxu0 0
      %442 = vmatpush.bf16.msra.mxu0 0
      %443 = vmatpush.bf16.msra.mxu0 0
      %444 = vmatpush.bf16.msra.mxu0 0
      %445 = vmatpush.bf16.msra.mxu0 %v430
      %446 = vmatmul.bf16.gmra.mxu0 %v426
      %v447 = vpop.f32.mrf.mxu0
      %v448 = vadd.f32 0.0, %v447
      %v449 = vpop.f32.mrf.mxu0
      %450 = vdwg.mxu0
      %451 = vmatpush.bf16.msra.mxu0 0
      %452 = vmatpush.bf16.msra.mxu0 0
      %453 = vmatpush.bf16.msra.mxu0 0
      %454 = vmatpush.bf16.msra.mxu0 0
      %455 = vmatpush.bf16.msra.mxu0 0
      %456 = vmatpush.bf16.msra.mxu0 0
      %457 = vmatpush.bf16.msra.mxu0 0
      %458 = vmatpush.bf16.msra.mxu0 %v433
      %459 = vmatmul.bf16.gmra.mxu0 %v426
      %v460 = vpop.f32.mrf.mxu0
      %v461 = vadd.f32 0.0, %v460
      %v462 = vpop.f32.mrf.mxu0
      %463 = vdwg.mxu0
      %464 = vmatpush.bf16.msra.mxu0 0
      %465 = vmatpush.bf16.msra.mxu0 0
      %466 = vmatpush.bf16.msra.mxu0 0
      %467 = vmatpush.bf16.msra.mxu0 0
      %468 = vmatpush.bf16.msra.mxu0 0
      %469 = vmatpush.bf16.msra.mxu0 0
      %470 = vmatpush.bf16.msra.mxu0 0
      %471 = vmatpush.bf16.msra.mxu0 %v436
      %472 = vmatmul.bf16.gmra.mxu0 %v426
      %v473 = vpop.f32.mrf.mxu0
      %v474 = vadd.f32 0.0, %v473
      %v475 = vpop.f32.mrf.mxu0
      %476 = vdwg.mxu0
      %v478 = vsel %vm424, %v405, 0
      %v480 = vsel %vm428, %v399, 0
      %v482 = vsel %vm428, %v401, 0
      %v484 = vsel %vm428, %v403, 0
      %486 = vmatpush.bf16.msra.mxu0 0
      %487 = vmatpush.bf16.msra.mxu0 0
      %488 = vmatpush.bf16.msra.mxu0 0
      %489 = vmatpush.bf16.msra.mxu0 0
      %490 = vmatpush.bf16.msra.mxu0 0
      %491 = vmatpush.bf16.msra.mxu0 0
      %492 = vmatpush.bf16.msra.mxu0 0
      %493 = vmatpush.bf16.msra.mxu0 %v480
      %494 = vmatmul.bf16.gmra.mxu0 %v478
      %v495 = vpop.f32.mrf.mxu0
      %v496 = vadd.f32 %v448, %v495
      %v497 = vpop.f32.mrf.mxu0
      %498 = vdwg.mxu0
      %499 = vmatpush.bf16.msra.mxu0 0
      %500 = vmatpush.bf16.msra.mxu0 0
      %501 = vmatpush.bf16.msra.mxu0 0
      %502 = vmatpush.bf16.msra.mxu0 0
      %503 = vmatpush.bf16.msra.mxu0 0
      %504 = vmatpush.bf16.msra.mxu0 0
      %505 = vmatpush.bf16.msra.mxu0 0
      %506 = vmatpush.bf16.msra.mxu0 %v482
      %507 = vmatmul.bf16.gmra.mxu0 %v478
      %v508 = vpop.f32.mrf.mxu0
      %v509 = vadd.f32 %v461, %v508
      %v510 = vpop.f32.mrf.mxu0
      %511 = vdwg.mxu0
      %512 = vmatpush.bf16.msra.mxu0 0
      %513 = vmatpush.bf16.msra.mxu0 0
      %514 = vmatpush.bf16.msra.mxu0 0
      %515 = vmatpush.bf16.msra.mxu0 0
      %516 = vmatpush.bf16.msra.mxu0 0
      %517 = vmatpush.bf16.msra.mxu0 0
      %518 = vmatpush.bf16.msra.mxu0 0
      %519 = vmatpush.bf16.msra.mxu0 %v484
      %520 = vmatmul.bf16.gmra.mxu0 %v478
      %v521 = vpop.f32.mrf.mxu0
      %v522 = vadd.f32 %v474, %v521
      %v523 = vpop.f32.mrf.mxu0
      %524 = vdwg.mxu0
      %525 = vrot.lane.b32.xlu0 %v408, 120
      %v526 = vpop.permute.xlu0 %525
      %527 = vrot.lane.b32.xlu0 %v399, 126
      %v528 = vpop.permute.xlu0 %527
      %529 = vrot.lane.b32.xlu0 %v401, 126
      %v530 = vpop.permute.xlu0 %529
      %531 = vrot.lane.b32.xlu0 %v403, 126
      %v532 = vpop.permute.xlu0 %531
      %533 = vrot.lane.b32.xlu0 %v396, 126
      %v534 = vpop.permute.xlu0 %533
      %vm535 = vcmask 1031168
      %v536 = vsel %vm535, %v528, %v530
      %v537 = vsel %vm535, %v530, %v532
      %v538 = vsel %vm535, %v532, %v534
      %v540 = vsel %vm424, %v526, 0
      %v543 = vsel %vm428, %v536, 0
      %v546 = vsel %vm428, %v537, 0
      %v549 = vsel %vm428, %v538, 0
      %551 = vmatpush.bf16.msra.mxu0 0
      %552 = vmatpush.bf16.msra.mxu0 0
      %553 = vmatpush.bf16.msra.mxu0 0
      %554 = vmatpush.bf16.msra.mxu0 0
      %555 = vmatpush.bf16.msra.mxu0 0
      %556 = vmatpush.bf16.msra.mxu0 0
      %557 = vmatpush.bf16.msra.mxu0 0
      %558 = vmatpush.bf16.msra.mxu0 %v543
      %559 = vmatmul.bf16.gmra.mxu0 %v540
      %v560 = vpop.f32.mrf.mxu0
      %v561 = vadd.f32 0.0, %v560
      %v562 = vpop.f32.mrf.mxu0
      %563 = vdwg.mxu0
      %564 = vmatpush.bf16.msra.mxu0 0
      %565 = vmatpush.bf16.msra.mxu0 0
      %566 = vmatpush.bf16.msra.mxu0 0
      %567 = vmatpush.bf16.msra.mxu0 0
      %568 = vmatpush.bf16.msra.mxu0 0
      %569 = vmatpush.bf16.msra.mxu0 0
      %570 = vmatpush.bf16.msra.mxu0 0
      %571 = vmatpush.bf16.msra.mxu0 %v546
      %572 = vmatmul.bf16.gmra.mxu0 %v540
      %v573 = vpop.f32.mrf.mxu0
      %v574 = vadd.f32 0.0, %v573
      %v575 = vpop.f32.mrf.mxu0
      %576 = vdwg.mxu0
      %577 = vmatpush.bf16.msra.mxu0 0
      %578 = vmatpush.bf16.msra.mxu0 0
      %579 = vmatpush.bf16.msra.mxu0 0
      %580 = vmatpush.bf16.msra.mxu0 0
      %581 = vmatpush.bf16.msra.mxu0 0
      %582 = vmatpush.bf16.msra.mxu0 0
      %583 = vmatpush.bf16.msra.mxu0 0
      %584 = vmatpush.bf16.msra.mxu0 %v549
      %585 = vmatmul.bf16.gmra.mxu0 %v540
      %v586 = vpop.f32.mrf.mxu0
      %v587 = vadd.f32 0.0, %v586
      %v588 = vpop.f32.mrf.mxu0
      %589 = vdwg.mxu0
      %v590 = vadd.f32 %v496, %v561
      %v591 = vadd.f32 %v509, %v574
      %v592 = vadd.f32 %v522, %v587
      %593 = vrot.lane.b32.xlu0 %v408, 116
      %v594 = vpop.permute.xlu0 %593
      %595 = vrot.lane.b32.xlu0 %v399, 110
      %v596 = vpop.permute.xlu0 %595
      %597 = vrot.lane.b32.xlu0 %v401, 110
      %v598 = vpop.permute.xlu0 %597
      %599 = vrot.lane.b32.xlu0 %v403, 110
      %v600 = vpop.permute.xlu0 %599
      %601 = vrot.lane.b32.xlu0 %v396, 110
      %v602 = vpop.permute.xlu0 %601
      %vm603 = vcmask 900096
      %v604 = vsel %vm603, %v596, %v598
      %v605 = vsel %vm603, %v598, %v600
      %v606 = vsel %vm603, %v600, %v602
      %v608 = vsel %vm424, %v594, 0
      %v611 = vsel %vm428, %v604, 0
      %v614 = vsel %vm428, %v605, 0
      %v617 = vsel %vm428, %v606, 0
      %619 = vmatpush.bf16.msra.mxu0 0
      %620 = vmatpush.bf16.msra.mxu0 0
      %621 = vmatpush.bf16.msra.mxu0 0
      %622 = vmatpush.bf16.msra.mxu0 0
      %623 = vmatpush.bf16.msra.mxu0 0
      %624 = vmatpush.bf16.msra.mxu0 0
      %625 = vmatpush.bf16.msra.mxu0 0
      %626 = vmatpush.bf16.msra.mxu0 %v611
      %627 = vmatmul.bf16.gmra.mxu0 %v608
      %v628 = vpop.f32.mrf.mxu0
      %v629 = vadd.f32 0.0, %v628
      %v630 = vpop.f32.mrf.mxu0
      %631 = vdwg.mxu0
      %632 = vmatpush.bf16.msra.mxu0 0
      %633 = vmatpush.bf16.msra.mxu0 0
      %634 = vmatpush.bf16.msra.mxu0 0
      %635 = vmatpush.bf16.msra.mxu0 0
      %636 = vmatpush.bf16.msra.mxu0 0
      %637 = vmatpush.bf16.msra.mxu0 0
      %638 = vmatpush.bf16.msra.mxu0 0
      %639 = vmatpush.bf16.msra.mxu0 %v614
      %640 = vmatmul.bf16.gmra.mxu0 %v608
      %v641 = vpop.f32.mrf.mxu0
      %v642 = vadd.f32 0.0, %v641
      %v643 = vpop.f32.mrf.mxu0
      %644 = vdwg.mxu0
      %645 = vmatpush.bf16.msra.mxu0 0
      %646 = vmatpush.bf16.msra.mxu0 0
      %647 = vmatpush.bf16.msra.mxu0 0
      %648 = vmatpush.bf16.msra.mxu0 0
      %649 = vmatpush.bf16.msra.mxu0 0
      %650 = vmatpush.bf16.msra.mxu0 0
      %651 = vmatpush.bf16.msra.mxu0 0
      %652 = vmatpush.bf16.msra.mxu0 %v617
      %653 = vmatmul.bf16.gmra.mxu0 %v608
      %v654 = vpop.f32.mrf.mxu0
      %v655 = vadd.f32 0.0, %v654
      %v656 = vpop.f32.mrf.mxu0
      %657 = vdwg.mxu0
      %v658 = vadd.f32 %v590, %v629
      %v659 = vadd.f32 %v591, %v642
      %v660 = vadd.f32 %v592, %v655
      %661 = vrot.lane.b32.xlu0 %v408, 112
      %v662 = vpop.permute.xlu0 %661
      %663 = vrot.lane.b32.xlu0 %v399, 109
      %v664 = vpop.permute.xlu0 %663
      %665 = vrot.lane.b32.xlu0 %v401, 109
      %v666 = vpop.permute.xlu0 %665
      %667 = vrot.lane.b32.xlu0 %v403, 109
      %v668 = vpop.permute.xlu0 %667
      %669 = vrot.lane.b32.xlu0 %v396, 109
      %v670 = vpop.permute.xlu0 %669
      %vm671 = vcmask 891904
      %v672 = vsel %vm671, %v664, %v666
      %v673 = vsel %vm671, %v666, %v668
      %v674 = vsel %vm671, %v668, %v670
      %v676 = vsel %vm424, %v662, 0
      %v679 = vsel %vm428, %v672, 0
      %v682 = vsel %vm428, %v673, 0
      %v685 = vsel %vm428, %v674, 0
      %687 = vmatpush.bf16.msra.mxu0 0
      %688 = vmatpush.bf16.msra.mxu0 0
      %689 = vmatpush.bf16.msra.mxu0 0
      %690 = vmatpush.bf16.msra.mxu0 0
      %691 = vmatpush.bf16.msra.mxu0 0
      %692 = vmatpush.bf16.msra.mxu0 0
      %693 = vmatpush.bf16.msra.mxu0 0
      %694 = vmatpush.bf16.msra.mxu0 %v679
      %695 = vmatmul.bf16.gmra.mxu0 %v676
      %v696 = vpop.f32.mrf.mxu0
      %v697 = vadd.f32 0.0, %v696
      %v698 = vpop.f32.mrf.mxu0
      %699 = vdwg.mxu0
      %700 = vmatpush.bf16.msra.mxu0 0
      %701 = vmatpush.bf16.msra.mxu0 0
      %702 = vmatpush.bf16.msra.mxu0 0
      %703 = vmatpush.bf16.msra.mxu0 0
      %704 = vmatpush.bf16.msra.mxu0 0
      %705 = vmatpush.bf16.msra.mxu0 0
      %706 = vmatpush.bf16.msra.mxu0 0
      %707 = vmatpush.bf16.msra.mxu0 %v682
      %708 = vmatmul.bf16.gmra.mxu0 %v676
      %v709 = vpop.f32.mrf.mxu0
      %v710 = vadd.f32 0.0, %v709
      %v711 = vpop.f32.mrf.mxu0
      %712 = vdwg.mxu0
      %713 = vmatpush.bf16.msra.mxu0 0
      %714 = vmatpush.bf16.msra.mxu0 0
      %715 = vmatpush.bf16.msra.mxu0 0
      %716 = vmatpush.bf16.msra.mxu0 0
      %717 = vmatpush.bf16.msra.mxu0 0
      %718 = vmatpush.bf16.msra.mxu0 0
      %719 = vmatpush.bf16.msra.mxu0 0
      %720 = vmatpush.bf16.msra.mxu0 %v685
      %721 = vmatmul.bf16.gmra.mxu0 %v676
      %v722 = vpop.f32.mrf.mxu0
      %v723 = vadd.f32 0.0, %v722
      %v724 = vpop.f32.mrf.mxu0
      %725 = vdwg.mxu0
      %v726 = vadd.f32 %v658, %v697
      %v727 = vadd.f32 %v659, %v710
      %v728 = vadd.f32 %v660, %v723
      %729 = vrot.lane.b32.xlu0 %v408, 108
      %v730 = vpop.permute.xlu0 %729
      %731 = vrot.lane.b32.xlu0 %v399, 108
      %v732 = vpop.permute.xlu0 %731
      %733 = vrot.lane.b32.xlu0 %v401, 108
      %v734 = vpop.permute.xlu0 %733
      %735 = vrot.lane.b32.xlu0 %v403, 108
      %v736 = vpop.permute.xlu0 %735
      %737 = vrot.lane.b32.xlu0 %v396, 108
      %v738 = vpop.permute.xlu0 %737
      %vm739 = vcmask 883712
      %v740 = vsel %vm739, %v732, %v734
      %v741 = vsel %vm739, %v734, %v736
      %v742 = vsel %vm739, %v736, %v738
      %v744 = vsel %vm424, %v730, 0
      %v747 = vsel %vm428, %v740, 0
      %v750 = vsel %vm428, %v741, 0
      %v753 = vsel %vm428, %v742, 0
      %755 = vmatpush.bf16.msra.mxu0 0
      %756 = vmatpush.bf16.msra.mxu0 0
      %757 = vmatpush.bf16.msra.mxu0 0
      %758 = vmatpush.bf16.msra.mxu0 0
      %759 = vmatpush.bf16.msra.mxu0 0
      %760 = vmatpush.bf16.msra.mxu0 0
      %761 = vmatpush.bf16.msra.mxu0 0
      %762 = vmatpush.bf16.msra.mxu0 %v747
      %763 = vmatmul.bf16.gmra.mxu0 %v744
      %v764 = vpop.f32.mrf.mxu0
      %v765 = vadd.f32 0.0, %v764
      %v766 = vpop.f32.mrf.mxu0
      %767 = vdwg.mxu0
      %768 = vmatpush.bf16.msra.mxu0 0
      %769 = vmatpush.bf16.msra.mxu0 0
      %770 = vmatpush.bf16.msra.mxu0 0
      %771 = vmatpush.bf16.msra.mxu0 0
      %772 = vmatpush.bf16.msra.mxu0 0
      %773 = vmatpush.bf16.msra.mxu0 0
      %774 = vmatpush.bf16.msra.mxu0 0
      %775 = vmatpush.bf16.msra.mxu0 %v750
      %776 = vmatmul.bf16.gmra.mxu0 %v744
      %v777 = vpop.f32.mrf.mxu0
      %v778 = vadd.f32 0.0, %v777
      %v779 = vpop.f32.mrf.mxu0
      %780 = vdwg.mxu0
      %781 = vmatpush.bf16.msra.mxu0 0
      %782 = vmatpush.bf16.msra.mxu0 0
      %783 = vmatpush.bf16.msra.mxu0 0
      %784 = vmatpush.bf16.msra.mxu0 0
      %785 = vmatpush.bf16.msra.mxu0 0
      %786 = vmatpush.bf16.msra.mxu0 0
      %787 = vmatpush.bf16.msra.mxu0 0
      %788 = vmatpush.bf16.msra.mxu0 %v753
      %789 = vmatmul.bf16.gmra.mxu0 %v744
      %v790 = vpop.f32.mrf.mxu0
      %v791 = vadd.f32 0.0, %v790
      %v792 = vpop.f32.mrf.mxu0
      %793 = vdwg.mxu0
      %v794 = vadd.f32 %v726, %v765
      %v795 = vadd.f32 %v727, %v778
      %v796 = vadd.f32 %v728, %v791
      %797 = vrot.lane.b32.xlu0 %v408, 104
      %v798 = vpop.permute.xlu0 %797
      %799 = vrot.lane.b32.xlu0 %v399, 92
      %v800 = vpop.permute.xlu0 %799
      %801 = vrot.lane.b32.xlu0 %v401, 92
      %v802 = vpop.permute.xlu0 %801
      %803 = vrot.lane.b32.xlu0 %v403, 92
      %v804 = vpop.permute.xlu0 %803
      %805 = vrot.lane.b32.xlu0 %v396, 92
      %v806 = vpop.permute.xlu0 %805
      %vm807 = vcmask 752640
      %v808 = vsel %vm807, %v800, %v802
      %v809 = vsel %vm807, %v802, %v804
      %v810 = vsel %vm807, %v804, %v806
      %v812 = vsel %vm424, %v798, 0
      %v815 = vsel %vm428, %v808, 0
      %v818 = vsel %vm428, %v809, 0
      %v821 = vsel %vm428, %v810, 0
      %823 = vmatpush.bf16.msra.mxu0 0
      %824 = vmatpush.bf16.msra.mxu0 0
      %825 = vmatpush.bf16.msra.mxu0 0
      %826 = vmatpush.bf16.msra.mxu0 0
      %827 = vmatpush.bf16.msra.mxu0 0
      %828 = vmatpush.bf16.msra.mxu0 0
      %829 = vmatpush.bf16.msra.mxu0 0
      %830 = vmatpush.bf16.msra.mxu0 %v815
      %831 = vmatmul.bf16.gmra.mxu0 %v812
      %v832 = vpop.f32.mrf.mxu0
      %v833 = vadd.f32 0.0, %v832
      %v834 = vpop.f32.mrf.mxu0
      %835 = vdwg.mxu0
      %836 = vmatpush.bf16.msra.mxu0 0
      %837 = vmatpush.bf16.msra.mxu0 0
      %838 = vmatpush.bf16.msra.mxu0 0
      %839 = vmatpush.bf16.msra.mxu0 0
      %840 = vmatpush.bf16.msra.mxu0 0
      %841 = vmatpush.bf16.msra.mxu0 0
      %842 = vmatpush.bf16.msra.mxu0 0
      %843 = vmatpush.bf16.msra.mxu0 %v818
      %844 = vmatmul.bf16.gmra.mxu0 %v812
      %v845 = vpop.f32.mrf.mxu0
      %v846 = vadd.f32 0.0, %v845
      %v847 = vpop.f32.mrf.mxu0
      %848 = vdwg.mxu0
      %849 = vmatpush.bf16.msra.mxu0 0
      %850 = vmatpush.bf16.msra.mxu0 0
      %851 = vmatpush.bf16.msra.mxu0 0
      %852 = vmatpush.bf16.msra.mxu0 0
      %853 = vmatpush.bf16.msra.mxu0 0
      %854 = vmatpush.bf16.msra.mxu0 0
      %855 = vmatpush.bf16.msra.mxu0 0
      %856 = vmatpush.bf16.msra.mxu0 %v821
      %857 = vmatmul.bf16.gmra.mxu0 %v812
      %v858 = vpop.f32.mrf.mxu0
      %v859 = vadd.f32 0.0, %v858
      %v860 = vpop.f32.mrf.mxu0
      %861 = vdwg.mxu0
      %v862 = vadd.f32 %v794, %v833
      %v863 = vadd.f32 %v795, %v846
      %v864 = vadd.f32 %v796, %v859
      %865 = vrot.lane.b32.xlu0 %v408, 100
      %v866 = vpop.permute.xlu0 %865
      %867 = vrot.lane.b32.xlu0 %v399, 91
      %v868 = vpop.permute.xlu0 %867
      %869 = vrot.lane.b32.xlu0 %v401, 91
      %v870 = vpop.permute.xlu0 %869
      %871 = vrot.lane.b32.xlu0 %v403, 91
      %v872 = vpop.permute.xlu0 %871
      %873 = vrot.lane.b32.xlu0 %v396, 91
      %v874 = vpop.permute.xlu0 %873
      %vm875 = vcmask 744448
      %v876 = vsel %vm875, %v868, %v870
      %v877 = vsel %vm875, %v870, %v872
      %v878 = vsel %vm875, %v872, %v874
      %v880 = vsel %vm424, %v866, 0
      %v883 = vsel %vm428, %v876, 0
      %v886 = vsel %vm428, %v877, 0
      %v889 = vsel %vm428, %v878, 0
      %891 = vmatpush.bf16.msra.mxu0 0
      %892 = vmatpush.bf16.msra.mxu0 0
      %893 = vmatpush.bf16.msra.mxu0 0
      %894 = vmatpush.bf16.msra.mxu0 0
      %895 = vmatpush.bf16.msra.mxu0 0
      %896 = vmatpush.bf16.msra.mxu0 0
      %897 = vmatpush.bf16.msra.mxu0 0
      %898 = vmatpush.bf16.msra.mxu0 %v883
      %899 = vmatmul.bf16.gmra.mxu0 %v880
      %v900 = vpop.f32.mrf.mxu0
      %v901 = vadd.f32 0.0, %v900
      %v902 = vpop.f32.mrf.mxu0
      %903 = vdwg.mxu0
      %904 = vmatpush.bf16.msra.mxu0 0
      %905 = vmatpush.bf16.msra.mxu0 0
      %906 = vmatpush.bf16.msra.mxu0 0
      %907 = vmatpush.bf16.msra.mxu0 0
      %908 = vmatpush.bf16.msra.mxu0 0
      %909 = vmatpush.bf16.msra.mxu0 0
      %910 = vmatpush.bf16.msra.mxu0 0
      %911 = vmatpush.bf16.msra.mxu0 %v886
      %912 = vmatmul.bf16.gmra.mxu0 %v880
      %v913 = vpop.f32.mrf.mxu0
      %v914 = vadd.f32 0.0, %v913
      %v915 = vpop.f32.mrf.mxu0
      %916 = vdwg.mxu0
      %917 = vmatpush.bf16.msra.mxu0 0
      %918 = vmatpush.bf16.msra.mxu0 0
      %919 = vmatpush.bf16.msra.mxu0 0
      %920 = vmatpush.bf16.msra.mxu0 0
      %921 = vmatpush.bf16.msra.mxu0 0
      %922 = vmatpush.bf16.msra.mxu0 0
      %923 = vmatpush.bf16.msra.mxu0 0
      %924 = vmatpush.bf16.msra.mxu0 %v889
      %925 = vmatmul.bf16.gmra.mxu0 %v880
      %v926 = vpop.f32.mrf.mxu0
      %v927 = vadd.f32 0.0, %v926
      %v928 = vpop.f32.mrf.mxu0
      %929 = vdwg.mxu0
      %v930 = vadd.f32 %v862, %v901
      %v931 = vadd.f32 %v863, %v914
      %v932 = vadd.f32 %v864, %v927
      %933 = vrot.lane.b32.xlu0 %v408, 96
      %v934 = vpop.permute.xlu0 %933
      %935 = vrot.lane.b32.xlu0 %v399, 90
      %v936 = vpop.permute.xlu0 %935
      %937 = vrot.lane.b32.xlu0 %v401, 90
      %v938 = vpop.permute.xlu0 %937
      %939 = vrot.lane.b32.xlu0 %v403, 90
      %v940 = vpop.permute.xlu0 %939
      %941 = vrot.lane.b32.xlu0 %v396, 90
      %v942 = vpop.permute.xlu0 %941
      %vm943 = vcmask 736256
      %v944 = vsel %vm943, %v936, %v938
      %v945 = vsel %vm943, %v938, %v940
      %v946 = vsel %vm943, %v940, %v942
      %v948 = vsel %vm424, %v934, 0
      %v951 = vsel %vm428, %v944, 0
      %v954 = vsel %vm428, %v945, 0
      %v957 = vsel %vm428, %v946, 0
      %959 = vmatpush.bf16.msra.mxu0 0
      %960 = vmatpush.bf16.msra.mxu0 0
      %961 = vmatpush.bf16.msra.mxu0 0
      %962 = vmatpush.bf16.msra.mxu0 0
      %963 = vmatpush.bf16.msra.mxu0 0
      %964 = vmatpush.bf16.msra.mxu0 0
      %965 = vmatpush.bf16.msra.mxu0 0
      %966 = vmatpush.bf16.msra.mxu0 %v951
      %967 = vmatmul.bf16.gmra.mxu0 %v948
      %v968 = vpop.f32.mrf.mxu0
      %v969 = vadd.f32 0.0, %v968
      %v970 = vpop.f32.mrf.mxu0
      %971 = vdwg.mxu0
      %972 = vmatpush.bf16.msra.mxu0 0
      %973 = vmatpush.bf16.msra.mxu0 0
      %974 = vmatpush.bf16.msra.mxu0 0
      %975 = vmatpush.bf16.msra.mxu0 0
      %976 = vmatpush.bf16.msra.mxu0 0
      %977 = vmatpush.bf16.msra.mxu0 0
      %978 = vmatpush.bf16.msra.mxu0 0
      %979 = vmatpush.bf16.msra.mxu0 %v954
      %980 = vmatmul.bf16.gmra.mxu0 %v948
      %v981 = vpop.f32.mrf.mxu0
      %v982 = vadd.f32 0.0, %v981
      %v983 = vpop.f32.mrf.mxu0
      %984 = vdwg.mxu0
      %985 = vmatpush.bf16.msra.mxu0 0
      %986 = vmatpush.bf16.msra.mxu0 0
      %987 = vmatpush.bf16.msra.mxu0 0
      %988 = vmatpush.bf16.msra.mxu0 0
      %989 = vmatpush.bf16.msra.mxu0 0
      %990 = vmatpush.bf16.msra.mxu0 0
      %991 = vmatpush.bf16.msra.mxu0 0
      %992 = vmatpush.bf16.msra.mxu0 %v957
      %993 = vmatmul.bf16.gmra.mxu0 %v948
      %v994 = vpop.f32.mrf.mxu0
      %v995 = vadd.f32 0.0, %v994
      %v996 = vpop.f32.mrf.mxu0
      %997 = vdwg.mxu0
      %v998 = vadd.f32 %v930, %v969
      %v999 = vadd.f32 %v931, %v982
      %v1000 = vadd.f32 %v932, %v995
      %v1001 = vld [vmem:[%s4] sm:$0xff]
      %1003 = vset.pattern.permute.xlu0 0
      %1004 = vperm.xlu0 %1003, %v1001
      %v1005 = vpop.permute.xlu0 %1004
      %v1007 = vadd.f32 %v998, %v1005
      %v1008 = vadd.f32 %v999, %v1005
      %v1009 = vadd.f32 %v1000, %v1005
      %v1010 = vpack.c.bf16 %v1008, %v1007
      %v1011 = vpack.c.bf16 %v1009, %v1009
      %1012 = vst [vmem:[%s385] sm:$0xff] %v1010
      %1013 = vst [vmem:[%s385 + $0x8] sm:$0xf] %v1011
      %v1014 = vld [vmem:[%s375] sm:$0x7]
      %v1016 = vperm.slane %v1014, 0
      %v1017 = vperm.slane %v1014, 1
      %v1018 = vperm.slane %v1014, 2
      %v1022 = vmul.f32 %v998, %v1016
      %v1023 = vmul.f32 %v999, %v1017
      %v1024 = vmul.f32 %v1000, %v1018
      %v1025 = vadd.f32 %v1022, %v1023
      %v1026 = vadd.f32 %v1025, %v1024
      %1027 = vadd.xlane.f32.xlu0 %v1026
      %v1028 = vpop.xlane.xlu0 %1027
      %v1029 = vmul.f32 %v1022, %v1022
      %v1030 = vmul.f32 %v1023, %v1023
      %v1031 = vmul.f32 %v1024, %v1024
      %v1032 = vadd.f32 %v1029, %v1030
      %v1033 = vadd.f32 %v1032, %v1031
      %1034 = vadd.xlane.f32.xlu0 %v1033
      %v1035 = vpop.xlane.xlu0 %1034
      %vm1036 = vcmask 7168
      %v1037 = vsel %vm1036, %v1028, %v1035
      %vm1038 = vcmask 15360
      %1039 = vst.msk [vmem:[%s393] sm:$0xff] %vm1038, %v1037
      %s1040 = smul.u32 3, %s23
      %p1041 = scmp.lt.s32.totalorder %s22, 1
      %s1042 = scalar_select %p1041, %s22, 1
      %p1043 = scmp.lt.s32.totalorder %s1040, 2
      %s1044 = scalar_select %p1043, %s1040, 2
      %s1045 = smul.addr %s1042, 3
      %s1046 = sadd.s32 %s1044, %s1045
      %s1047 = smul.addr %s1046, 4
      %s1048 = scalar_lea.vmem %s5, %s1047
      %p1049 = scmp.lt.s32.totalorder %s22, 1
      %s1050 = scalar_select %p1049, %s22, 1
      %p1051 = scmp.lt.s32.totalorder %s23, 0
      %s1052 = scalar_select %p1051, %s23, 0
      %s1053 = sadd.s32 %s1052, %s1050
      %s1054 = smul.addr %s1053, 8
      %s1055 = scalar_lea.vmem %s6, %s1054
      // Predicated region
      $region41: #{convolutional_block.2} parent=39 // pred_check
        %p1056 = pneg %p178
      $region42: #{convolutional_block.2} parent=39 // pred_check_branch
        %1058 = sbr.rel (%p1056) target = $region44
      $region43: #{convolutional_block.2} parent=39 // pred_region
        %s1059 = smul.u32 3, %s23
      $region44: #{convolutional_block.2} parent=39 // pred_fallthru
        _
      // Predicated region
      $region45: #{convolutional_block.2} parent=39 // pred_check
        %p1060 = pneg %p206
      $region46: #{convolutional_block.2} parent=39 // pred_check_branch
        %1062 = sbr.rel (%p1060) target = $region48
      $region47: #{convolutional_block.2} parent=39 // pred_region
        _
      $region48: #{convolutional_block.2} parent=39 // pred_fallthru
        _
    $region40: #{convolutional_block.2} parent=5 // pred_fallthru
      _
    %p1063 = scmp.le.s32.totalorder 2, %s13
    // Predicated region
    $region49: #{convolutional_block.2} parent=5 // pred_check
      %p1064 = pneg %p1063
    $region50: #{convolutional_block.2} parent=5 // pred_check_branch
      %1066 = sbr.rel (%p1064) target = $region52
    $region51: #{convolutional_block.2} parent=5 // pred_region
      %s1067 = ssub.s32 %s13, 2
      // Predicated region
      $region53: #{convolutional_block.2} parent=51 // pred_check
        %p1068 = pneg %p184
      $region54: #{convolutional_block.2} parent=51 // pred_check_branch
        %1070 = sbr.rel (%p1068) target = $region56
      $region55: #{convolutional_block.2} parent=51 // pred_region
        %s1071 = smul.u32 3, %s25
        %p1072 = scmp.lt.s32.totalorder %s24, 1
        %s1073 = scalar_select %p1072, %s24, 1
        %p1074 = scmp.lt.s32.totalorder %s1071, 2
        %s1075 = scalar_select %p1074, %s1071, 2
        %s1076 = smul.addr %s1073, 3
        %s1077 = sadd.s32 %s1075, %s1076
        %s1078 = smul.addr %s1077, 4
        %s1079 = scalar_lea.vmem %s5, %s1078
      $region56: #{convolutional_block.2} parent=51 // pred_fallthru
        _
      // Predicated region
      $region57: #{convolutional_block.2} parent=51 // pred_check
        %p1080 = pneg %p212
      $region58: #{convolutional_block.2} parent=51 // pred_check_branch
        %1082 = sbr.rel (%p1080) target = $region60
      $region59: #{convolutional_block.2} parent=51 // pred_region
        %p1083 = scmp.lt.s32.totalorder %s24, 1
        %s1084 = scalar_select %p1083, %s24, 1
        %p1085 = scmp.lt.s32.totalorder %s25, 0
        %s1086 = scalar_select %p1085, %s25, 0
        %s1087 = sadd.s32 %s1086, %s1084
        %s1088 = smul.addr %s1087, 8
        %s1089 = scalar_lea.vmem %s6, %s1088
      $region60: #{convolutional_block.2} parent=51 // pred_fallthru
        _
    $region52: #{convolutional_block.2} parent=5 // pred_fallthru
      _
  $region6: #{convolutional_block.2} parent=0 // loop_footer
    %s17 = sadd.s32 1, %s13
  $region7: #{convolutional_block.2} parent=0 // loop_footer_branch
    %12 = sbr.rel target = $region3
  $region8: #{convolutional_block.2} parent=0 // loop_exit
    _

</llo_original>
